<compile_context>
chip_gen: v6e
topology: v6e:2x2x1
jax: 0.10.0
libtpu: 0.0.40
codegen_flags: <defaults>
</compile_context>

<pallas_src>
import functools

import jax
import jax.numpy as jnp
from jax.experimental import pallas as pl
from jax.experimental.pallas import tpu as pltpu


# -----------------------------------------------------------------------------
# Fused Linear (+bias) + activation epilogue  — single Pallas MXU kernel.
# -----------------------------------------------------------------------------
def _apply_act(acc, act):
    if act == "relu":
        return jnp.maximum(acc, 0.0)
    if act == "relu6":
        return jnp.clip(acc, 0.0, 6.0)
    if act == "h_sigmoid":  # relu6(x + 3) / 6   (h_max = 1)
        return jnp.clip(acc + 3.0, 0.0, 6.0) * (1.0 / 6.0)
    if act == "gelu":
        return jax.nn.gelu(acc, approximate=True)
    return acc


def _make_linear_kernel(act):
    def kernel(x_ref, w_ref, b_ref, o_ref):
        # f32 accumulation on the MXU; activation fused as the epilogue.
        acc = jnp.dot(
            x_ref[...].astype(jnp.float32),
            w_ref[...].astype(jnp.float32),
            preferred_element_type=jnp.float32,
        )
        acc = acc + b_ref[...]
        o_ref[...] = _apply_act(acc, act).astype(o_ref.dtype)

    return kernel


def _pick_block_m(m, k, itemsize):
    """Byte-based LHS block sizing (~2 MiB per grid step), sublane aligned."""
    if m <= 1024:
        return m
    rows = max(8, (2 * 1024 * 1024) // max(1, k * itemsize))
    return max(8, min(m, (rows // 8) * 8))


def linear_act(x, w, b, act="none"):
    """y = act(x @ w + b).  x: (..., K), w: (K, N), b: (N,)."""
    k = x.shape[-1]
    n = w.shape[-1]
    lead = x.shape[:-1]
    x2 = x.reshape(-1, k)
    m = x2.shape[0]

    # Tiny-M hedge: pad rows to a sublane multiple (only hits (2, token_dim)
    # HyperFunc inputs in this script; cost is negligible).
    pad_m = (-m) % 8
    if pad_m:
        x2 = jnp.pad(x2, ((0, pad_m), (0, 0)))
    mp = x2.shape[0]

    b2 = b.reshape(1, n).astype(jnp.float32)
    bm = _pick_block_m(mp, k, x2.dtype.itemsize)
    grid = (pl.cdiv(mp, bm),)

    out = pl.pallas_call(
        _make_linear_kernel(act),
        out_shape=jax.ShapeDtypeStruct((mp, n), x.dtype),
        grid=grid,
        in_specs=[
            pl.BlockSpec((bm, k), lambda i: (i, 0)),
            pl.BlockSpec((k, n), lambda i: (0, 0)),
            pl.BlockSpec((1, n), lambda i: (0, 0)),
        ],
        out_specs=pl.BlockSpec((bm, n), lambda i: (i, 0)),
        compiler_params=pltpu.CompilerParams(dimension_semantics=("parallel",)),
    )(x2, w, b2)

    if pad_m:
        out = out[:m]
    return out.reshape(lead + (n,))


# -----------------------------------------------------------------------------
# LayerNorm kernel (normalize over last dim).
# -----------------------------------------------------------------------------
def _layernorm_kernel(x_ref, g_ref, b_ref, o_ref):
    x = x_ref[...].astype(jnp.float32)
    mu = jnp.mean(x, axis=-1, keepdims=True)
    xc = x - mu
    var = jnp.mean(xc * xc, axis=-1, keepdims=True)
    inv = jax.lax.rsqrt(var + 1e-5)
    y = xc * inv * g_ref[...].astype(jnp.float32) + b_ref[...].astype(jnp.float32)
    o_ref[...] = y.astype(o_ref.dtype)


def layer_norm(x, gamma, beta):
    d = x.shape[-1]
    lead = x.shape[:-1]
    x2 = x.reshape(-1, d)
    m = x2.shape[0]
    bm = m if m <= 1024 else 1024
    grid = (pl.cdiv(m, bm),)
    out = pl.pallas_call(
        _layernorm_kernel,
        out_shape=jax.ShapeDtypeStruct((m, d), x.dtype),
        grid=grid,
        in_specs=[
            pl.BlockSpec((bm, d), lambda i: (i, 0)),
            pl.BlockSpec((1, d), lambda i: (0, 0)),
            pl.BlockSpec((1, d), lambda i: (0, 0)),
        ],
        out_specs=pl.BlockSpec((bm, d), lambda i: (i, 0)),
        compiler_params=pltpu.CompilerParams(dimension_semantics=("parallel",)),
    )(x2, gamma.reshape(1, d), beta.reshape(1, d))
    return out.reshape(lead + (d,))


# -----------------------------------------------------------------------------
# Pure-jnp references (for correctness check).
# -----------------------------------------------------------------------------
def _linear_ref(x, w, b, act="none"):
    y = jnp.dot(x, w, precision=jax.lax.Precision.HIGHEST) + b
    return _apply_act(y, act).astype(x.dtype)


def _layernorm_ref(x, g, b):
    mu = jnp.mean(x, axis=-1, keepdims=True)
    var = jnp.mean((x - mu) ** 2, axis=-1, keepdims=True)
    return (x - mu) * jax.lax.rsqrt(var + 1e-5) * g + b


# -----------------------------------------------------------------------------
# Elementwise / conv glue (left to XLA fusion, per review).
# -----------------------------------------------------------------------------
def dy_relu2(out, hp, scale=2.0):
    """DyReLU num_func=2: out = max(out*a1, out*a2), a from a hyper h_sigmoid."""
    c = out.shape[1]
    a1 = hp[:, :c, None, None]
    a2 = hp[:, c:, None, None]
    a1 = (a1 - 0.5) * scale + 1.0
    a2 = (a2 - 0.5) * scale
    return jnp.maximum(out * a1, out * a2)


def depthwise_conv_bn(x, w, scale, shift, stride):
    """Depthwise kxk conv (torch layout (C,1,k,k)) + folded eval-mode BN."""
    c = x.shape[1]
    k = w.shape[-1]
    pad = k // 2
    y = jax.lax.conv_general_dilated(
        x, w, window_strides=(stride, stride), padding=[(pad, pad), (pad, pad)],
        dimension_numbers=("NCHW", "OIHW", "NCHW"), feature_group_count=c)
    return y * scale[None, :, None, None] + shift[None, :, None, None]


# -----------------------------------------------------------------------------
# DnaBlock forward (default config: gbr_type='mlp', se_flag=[2,0,2,0],
# hyper_token_id=0, dynamic off, ffn off, gbr_before_skip=False, stride=1).
# -----------------------------------------------------------------------------
def dna_block_forward(params, features, tokens, *, stride, identity, use_pallas):
    lin = linear_act if use_pallas else _linear_ref
    ln = layer_norm if use_pallas else _layernorm_ref
    p = params

    bs, c_in, h, w = features.shape

    # ---- Local2Global (mlp branch) -----------------------------------------
    feat_flat = features.reshape(bs, c_in, h * w)                      # (bs,C,HW)
    t_sum = lin(feat_flat, p["l2g_mlp_w"], p["l2g_mlp_b"])             # (bs,C,T)
    t_sum = jnp.transpose(t_sum, (2, 0, 1))                            # (T,bs,C)
    t_sum = lin(t_sum, p["l2g_proj_w"], p["l2g_proj_b"])               # (T,bs,D)
    tokens = tokens + t_sum                                            # DropPath=id
    tokens = ln(tokens, p["l2g_ln_g"], p["l2g_ln_b"])

    # ---- GlobalBlock (mlp branch) ------------------------------------------
    t = jnp.transpose(tokens, (1, 2, 0))                               # (bs,D,T)
    t = lin(t, p["g2g_tok1_w"], p["g2g_tok1_b"], act="gelu")
    t = lin(t, p["g2g_tok2_w"], p["g2g_tok2_b"])
    t_sum = jnp.transpose(t, (2, 0, 1))                                # (T,bs,D)
    t_sum = lin(t_sum, p["g2g_ch_w"], p["g2g_ch_b"])
    tokens = tokens + t_sum
    tokens = ln(tokens, p["g2g_ln_g"], p["g2g_ln_b"])

    # ---- conv1: 1x1 conv + folded BN (as a Pallas matmul) --------------------
    x_rows = jnp.transpose(features, (0, 2, 3, 1)).reshape(bs * h * w, c_in)
    out = lin(x_rows, p["conv1_w"], p["conv1_b"])                      # (bs*HW,hid)
    hidden = out.shape[-1]
    out = jnp.transpose(out.reshape(bs, h, w, hidden), (0, 3, 1, 2))   # (bs,hid,H,W)

    # ---- hyper1 (h_sigmoid fused as matmul epilogue) + DyReLU(2) -------------
    t0 = tokens[0]                                                     # (bs,D)
    hp = lin(t0, p["hyp1_fc1_w"], p["hyp1_fc1_b"], act="relu")
    hp = lin(hp, p["hyp1_fc2_w"], p["hyp1_fc2_b"], act="h_sigmoid")    # (bs,2*hid)
    out = dy_relu2(out, hp, scale=2.0)

    # ---- conv2: depthwise kxk + BN (XLA) -------------------------------------
    out = depthwise_conv_bn(out, p["conv2_w"], p["conv2_scale"], p["conv2_shift"],
                            stride)
    ho, wo = out.shape[2], out.shape[3]

    # ---- hyper2 + DyReLU(2) ---------------------------------------------------
    hp = lin(t0, p["hyp2_fc1_w"], p["hyp2_fc1_b"], act="relu")
    hp = lin(hp, p["hyp2_fc2_w"], p["hyp2_fc2_b"], act="h_sigmoid")
    out = dy_relu2(out, hp, scale=2.0)

    # ---- conv3: 1x1 conv + folded BN (Pallas matmul); act3 = identity --------
    x_rows = jnp.transpose(out, (0, 2, 3, 1)).reshape(bs * ho * wo, hidden)
    out = lin(x_rows, p["conv3_w"], p["conv3_b"])
    oup = out.shape[-1]
    out = jnp.transpose(out.reshape(bs, ho, wo, oup), (0, 3, 1, 2))

    # ---- residual skip, then Global2Local (mlp branch) -----------------------
    if identity:
        out = out + features
    v = lin(tokens, p["g2l_proj_w"], p["g2l_proj_b"])                  # (T,bs,oup)
    v = jnp.transpose(v, (1, 2, 0))                                    # (bs,oup,T)
    g = lin(v, p["g2l_mlp_w"], p["g2l_mlp_b"])                         # (bs,oup,HWo)
    g = g.reshape(bs, oup, ho, wo)
    out = out + g

    return out, tokens


# -----------------------------------------------------------------------------
# Parameter construction (deterministic, PRNGKey(0)).
# -----------------------------------------------------------------------------
def _init_linear(key, k_in, n_out):
    kw, kb = jax.random.split(key)
    w = jax.random.normal(kw, (k_in, n_out), jnp.float32) * (k_in ** -0.5)
    b = 0.05 * jax.random.normal(kb, (n_out,), jnp.float32)
    return w, b


def _init_bn(key, c):
    kg, kb = jax.random.split(key)
    gamma = 1.0 + 0.1 * jax.random.normal(kg, (c,), jnp.float32)
    beta = 0.1 * jax.random.normal(kb, (c,), jnp.float32)
    mean = jnp.zeros((c,), jnp.float32)     # fresh-module eval running stats
    var = jnp.ones((c,), jnp.float32)
    return gamma, beta, mean, var


def _fold_bn(w, bn, eps=1e-5):
    gamma, beta, mean, var = bn
    scale = gamma / jnp.sqrt(var + eps)
    return w * scale[None, :], beta - mean * scale


def make_params(key, *, inp, oup, hidden, token_dim, token_num, inp_res,
                squeeze, k1, mlp_token_exp):
    keys = jax.random.split(key, 20)
    p = {}
    # Local2Global
    p["l2g_mlp_w"], p["l2g_mlp_b"] = _init_linear(keys[0], inp_res, token_num)
    p["l2g_proj_w"], p["l2g_proj_b"] = _init_linear(keys[1], inp, token_dim)
    p["l2g_ln_g"] = jnp.ones((token_dim,), jnp.float32)
    p["l2g_ln_b"] = jnp.zeros((token_dim,), jnp.float32)
    # GlobalBlock
    p["g2g_tok1_w"], p["g2g_tok1_b"] = _init_linear(keys[2], token_num,
                                                    token_num * mlp_token_exp)
    p["g2g_tok2_w"], p["g2g_tok2_b"] = _init_linear(keys[3],
                                                    token_num * mlp_token_exp,
                                                    token_num)
    p["g2g_ch_w"], p["g2g_ch_b"] = _init_linear(keys[4], token_dim, token_dim)
    p["g2g_ln_g"] = jnp.ones((token_dim,), jnp.float32)
    p["g2g_ln_b"] = jnp.zeros((token_dim,), jnp.float32)
    # conv1 (1x1, bias=False) + BN folded
    w1 = jax.random.normal(keys[5], (inp, hidden), jnp.float32) * (inp ** -0.5)
    p["conv1_w"], p["conv1_b"] = _fold_bn(w1, _init_bn(keys[6], hidden))
    # HyperFunc 1 & 2
    p["hyp1_fc1_w"], p["hyp1_fc1_b"] = _init_linear(keys[7], token_dim, squeeze)
    p["hyp1_fc2_w"], p["hyp1_fc2_b"] = _init_linear(keys[8], squeeze, 2 * hidden)
    p["hyp2_fc1_w"], p["hyp2_fc1_b"] = _init_linear(keys[9], token_dim, squeeze)
    p["hyp2_fc2_w"], p["hyp2_fc2_b"] = _init_linear(keys[10], squeeze, 2 * hidden)
    # conv2 (depthwise) + BN (as post scale/shift)
    p["conv2_w"] = jax.random.normal(keys[11], (hidden, 1, k1, k1),
                                     jnp.float32) * ((k1 * k1) ** -0.5)
    g, b, m, v = _init_bn(keys[12], hidden)
    s = g / jnp.sqrt(v + 1e-5)
    p["conv2_scale"], p["conv2_shift"] = s, b - m * s
    # conv3 (1x1) + BN folded
    w3 = jax.random.normal(keys[13], (hidden, oup), jnp.float32) * (hidden ** -0.5)
    p["conv3_w"], p["conv3_b"] = _fold_bn(w3, _init_bn(keys[14], oup))
    # Global2Local
    p["g2l_proj_w"], p["g2l_proj_b"] = _init_linear(keys[15], token_dim, oup)
    p["g2l_mlp_w"], p["g2l_mlp_b"] = _init_linear(keys[16], token_num, inp_res)
    return p


if __name__ == "__main__":
    key = jax.random.PRNGKey(0)
    kp, kf, kt = jax.random.split(key, 3)

    # DnaBlock config: inp=oup=16, stride=1, exp_ratios=(4,4) -> hidden=64,
    # kernel=(3,3), se_flag=[2,0,2,0], token_dim=32, token_num=8, spatial 8x8.
    inp = oup = 16
    stride = 1
    hidden = inp * 4
    token_dim, token_num = 32, 8
    h = w = 8
    inp_res = h * w
    squeeze = token_dim // 4

    params = make_params(kp, inp=inp, oup=oup, hidden=hidden, token_dim=token_dim,
                         token_num=token_num, inp_res=inp_res, squeeze=squeeze,
                         k1=3, mlp_token_exp=4)
    features = jax.random.normal(kf, (2, inp, h, w), jnp.float32)
    tokens = jax.random.normal(kt, (token_num, 2, token_dim), jnp.float32)

    fwd = jax.jit(functools.partial(dna_block_forward, stride=stride,
                                    identity=True, use_pallas=True))
    out, toks = fwd(params, features, tokens)
    out = jax.block_until_ready(out)
    toks = jax.block_until_ready(toks)

    # Pure-jnp reference (same math, no Pallas).
    out_ref, toks_ref = dna_block_forward(params, features, tokens, stride=stride,
                                          identity=True, use_pallas=False)

    assert out.shape == (2, oup, h, w) and out.dtype == jnp.float32
    assert toks.shape == (token_num, 2, token_dim)
    assert jnp.allclose(out, out_ref, atol=2e-2, rtol=2e-2), "out mismatch"
    assert jnp.allclose(toks, toks_ref, atol=2e-2, rtol=2e-2), "tokens mismatch"

    print("KERNEL_OK")
</pallas_src>

<mosaic_0001>
module attributes {stable_mosaic.version = 11 : i64} {
  func.func @kernel(%arg0: i32, %arg1: memref<32x64xf32, #tpu.memory_space<vmem>>, %arg2: memref<64x8xf32, #tpu.memory_space<vmem>>, %arg3: memref<1x8xf32, #tpu.memory_space<vmem>>, %arg4: memref<32x8xf32, #tpu.memory_space<vmem>>) attributes {dimension_semantics = [#tpu.dimension_semantics<parallel>], iteration_bounds = array<i64: 1>, scalar_prefetch = 0 : i64, scratch_operands = 0 : i64, tpu.core_type = #tpu.core_type<tc>, window_params = [{transform_indices = @transform_0, window_bounds = array<i64: 32, 64>}, {pipeline_mode = #tpu.pipeline_mode<synchronous>, transform_indices = @transform_1, window_bounds = array<i64: 64, 8>}, {pipeline_mode = #tpu.pipeline_mode<synchronous>, transform_indices = @transform_2, window_bounds = array<i64: 1, 8>}, {transform_indices = @transform_3, window_bounds = array<i64: 32, 8>}]} {
    %c0 = arith.constant 0 : index
    %c0_0 = arith.constant 0 : index
    %0 = vector.load %arg1[%c0, %c0_0] : memref<32x64xf32, #tpu.memory_space<vmem>>, vector<32x64xf32>
    %c0_1 = arith.constant 0 : index
    %c0_2 = arith.constant 0 : index
    %1 = vector.load %arg2[%c0_1, %c0_2] : memref<64x8xf32, #tpu.memory_space<vmem>>, vector<64x8xf32>
    %cst = arith.constant dense<0.000000e+00> : vector<32x8xf32>
    %2 = tpu.matmul %0, %1, %cst {dimension_numbers = #tpu.dot_dimension_numbers<[1], [0], [0], [1], [0, 0, 1, 1], [], []>} : vector<32x64xf32>, vector<64x8xf32>, vector<32x8xf32> -> vector<32x8xf32>
    %c0_3 = arith.constant 0 : index
    %c0_4 = arith.constant 0 : index
    %3 = vector.load %arg3[%c0_3, %c0_4] : memref<1x8xf32, #tpu.memory_space<vmem>>, vector<1x8xf32>
    %4 = vector.broadcast %3 : vector<1x8xf32> to vector<32x8xf32>
    %5 = arith.addf %2, %4 : vector<32x8xf32>
    %c0_5 = arith.constant 0 : index
    %c0_6 = arith.constant 0 : index
    %6 = vector.load %arg4[%c0_5, %c0_6] : memref<32x8xf32, #tpu.memory_space<vmem>>, vector<32x8xf32>
    tpu.vector_store %arg4[%c0_5, %c0_6], %5 {strides = array<i32>} : memref<32x8xf32, #tpu.memory_space<vmem>>, vector<32x8xf32>,
    return
  }
  func.func @transform_0(%arg0: i32) -> (i32, i32) {
    %c0_i32 = arith.constant 0 : i32
    %c0_i32_0 = arith.constant 0 : i32
    return %arg0, %c0_i32 : i32, i32
  }
  func.func @transform_1(%arg0: i32) -> (i32, i32) {
    %c0_i32 = arith.constant 0 : i32
    %c0_i32_0 = arith.constant 0 : i32
    %c0_i32_1 = arith.constant 0 : i32
    return %c0_i32, %c0_i32_0 : i32, i32
  }
  func.func @transform_2(%arg0: i32) -> (i32, i32) {
    %c0_i32 = arith.constant 0 : i32
    %c0_i32_0 = arith.constant 0 : i32
    %c0_i32_1 = arith.constant 0 : i32
    return %c0_i32, %c0_i32_0 : i32, i32
  }
  func.func @transform_3(%arg0: i32) -> (i32, i32) {
    %c0_i32 = arith.constant 0 : i32
    %c0_i32_0 = arith.constant 0 : i32
    return %arg0, %c0_i32 : i32, i32
  }
}

module attributes {stable_mosaic.version = 11 : i64} {
  func.func @kernel(%arg0: i32, %arg1: memref<16x16xf32, #tpu.memory_space<vmem>>, %arg2: memref<16x32xf32, #tpu.memory_space<vmem>>, %arg3: memref<1x32xf32, #tpu.memory_space<vmem>>, %arg4: memref<16x32xf32, #tpu.memory_space<vmem>>) attributes {dimension_semantics = [#tpu.dimension_semantics<parallel>], iteration_bounds = array<i64: 1>, scalar_prefetch = 0 : i64, scratch_operands = 0 : i64, tpu.core_type = #tpu.core_type<tc>, window_params = [{transform_indices = @transform_0, window_bounds = array<i64: 16, 16>}, {pipeline_mode = #tpu.pipeline_mode<synchronous>, transform_indices = @transform_1, window_bounds = array<i64: 16, 32>}, {pipeline_mode = #tpu.pipeline_mode<synchronous>, transform_indices = @transform_2, window_bounds = array<i64: 1, 32>}, {transform_indices = @transform_3, window_bounds = array<i64: 16, 32>}]} {
    %c0 = arith.constant 0 : index
    %c0_0 = arith.constant 0 : index
    %0 = vector.load %arg1[%c0, %c0_0] : memref<16x16xf32, #tpu.memory_space<vmem>>, vector<16x16xf32>
    %c0_1 = arith.constant 0 : index
    %c0_2 = arith.constant 0 : index
    %1 = vector.load %arg2[%c0_1, %c0_2] : memref<16x32xf32, #tpu.memory_space<vmem>>, vector<16x32xf32>
    %cst = arith.constant dense<0.000000e+00> : vector<16x32xf32>
    %2 = tpu.matmul %0, %1, %cst {dimension_numbers = #tpu.dot_dimension_numbers<[1], [0], [0], [1], [0, 0, 1, 1], [], []>} : vector<16x16xf32>, vector<16x32xf32>, vector<16x32xf32> -> vector<16x32xf32>
    %c0_3 = arith.constant 0 : index
    %c0_4 = arith.constant 0 : index
    %3 = vector.load %arg3[%c0_3, %c0_4] : memref<1x32xf32, #tpu.memory_space<vmem>>, vector<1x32xf32>
    %4 = vector.broadcast %3 : vector<1x32xf32> to vector<16x32xf32>
    %5 = arith.addf %2, %4 : vector<16x32xf32>
    %c0_5 = arith.constant 0 : index
    %c0_6 = arith.constant 0 : index
    %6 = vector.load %arg4[%c0_5, %c0_6] : memref<16x32xf32, #tpu.memory_space<vmem>>, vector<16x32xf32>
    tpu.vector_store %arg4[%c0_5, %c0_6], %5 {strides = array<i32>} : memref<16x32xf32, #tpu.memory_space<vmem>>, vector<16x32xf32>,
    return
  }
  func.func @transform_0(%arg0: i32) -> (i32, i32) {
    %c0_i32 = arith.constant 0 : i32
    %c0_i32_0 = arith.constant 0 : i32
    return %arg0, %c0_i32 : i32, i32
  }
  func.func @transform_1(%arg0: i32) -> (i32, i32) {
    %c0_i32 = arith.constant 0 : i32
    %c0_i32_0 = arith.constant 0 : i32
    %c0_i32_1 = arith.constant 0 : i32
    return %c0_i32, %c0_i32_0 : i32, i32
  }
  func.func @transform_2(%arg0: i32) -> (i32, i32) {
    %c0_i32 = arith.constant 0 : i32
    %c0_i32_0 = arith.constant 0 : i32
    %c0_i32_1 = arith.constant 0 : i32
    return %c0_i32, %c0_i32_0 : i32, i32
  }
  func.func @transform_3(%arg0: i32) -> (i32, i32) {
    %c0_i32 = arith.constant 0 : i32
    %c0_i32_0 = arith.constant 0 : i32
    return %arg0, %c0_i32 : i32, i32
  }
}

module attributes {stable_mosaic.version = 11 : i64} {
  func.func @_layernorm_kernel(%arg0: i32, %arg1: memref<16x32xf32, #tpu.memory_space<vmem>>, %arg2: memref<1x32xf32, #tpu.memory_space<vmem>>, %arg3: memref<1x32xf32, #tpu.memory_space<vmem>>, %arg4: memref<16x32xf32, #tpu.memory_space<vmem>>) attributes {dimension_semantics = [#tpu.dimension_semantics<parallel>], iteration_bounds = array<i64: 1>, scalar_prefetch = 0 : i64, scratch_operands = 0 : i64, tpu.core_type = #tpu.core_type<tc>, window_params = [{transform_indices = @transform_0, window_bounds = array<i64: 16, 32>}, {pipeline_mode = #tpu.pipeline_mode<synchronous>, transform_indices = @transform_1, window_bounds = array<i64: 1, 32>}, {pipeline_mode = #tpu.pipeline_mode<synchronous>, transform_indices = @transform_2, window_bounds = array<i64: 1, 32>}, {transform_indices = @transform_3, window_bounds = array<i64: 16, 32>}]} {
    %c0 = arith.constant 0 : index
    %c0_0 = arith.constant 0 : index
    %0 = vector.load %arg1[%c0, %c0_0] : memref<16x32xf32, #tpu.memory_space<vmem>>, vector<16x32xf32>
    %cst = arith.constant dense<0.000000e+00> : vector<16xf32>
    %1 = vector.multi_reduction <add>, %0, %cst [1] : vector<16x32xf32> to vector<16xf32>
    %2 = vector.shape_cast %1 : vector<16xf32> to vector<16x1xf32>
    %cst_1 = arith.constant 3.200000e+01 : f32
    %3 = vector.broadcast %cst_1 : f32 to vector<16x1xf32>
    %4 = arith.divf %2, %3 : vector<16x1xf32>
    %5 = vector.broadcast %4 : vector<16x1xf32> to vector<16x32xf32>
    %6 = arith.subf %0, %5 : vector<16x32xf32>
    %7 = arith.mulf %6, %6 : vector<16x32xf32>
    %cst_2 = arith.constant dense<0.000000e+00> : vector<16xf32>
    %8 = vector.multi_reduction <add>, %7, %cst_2 [1] : vector<16x32xf32> to vector<16xf32>
    %9 = vector.shape_cast %8 : vector<16xf32> to vector<16x1xf32>
    %cst_3 = arith.constant 3.200000e+01 : f32
    %10 = vector.broadcast %cst_3 : f32 to vector<16x1xf32>
    %11 = arith.divf %9, %10 : vector<16x1xf32>
    %cst_4 = arith.constant 9.99999974E-6 : f32
    %12 = vector.broadcast %cst_4 : f32 to vector<16x1xf32>
    %13 = arith.addf %11, %12 : vector<16x1xf32>
    %14 = math.rsqrt %13 : vector<16x1xf32>
    %15 = vector.broadcast %14 : vector<16x1xf32> to vector<16x32xf32>
    %16 = arith.mulf %6, %15 : vector<16x32xf32>
    %c0_5 = arith.constant 0 : index
    %c0_6 = arith.constant 0 : index
    %17 = vector.load %arg2[%c0_5, %c0_6] : memref<1x32xf32, #tpu.memory_space<vmem>>, vector<1x32xf32>
    %18 = vector.broadcast %17 : vector<1x32xf32> to vector<16x32xf32>
    %19 = arith.mulf %16, %18 : vector<16x32xf32>
    %c0_7 = arith.constant 0 : index
    %c0_8 = arith.constant 0 : index
    %20 = vector.load %arg3[%c0_7, %c0_8] : memref<1x32xf32, #tpu.memory_space<vmem>>, vector<1x32xf32>
    %21 = vector.broadcast %20 : vector<1x32xf32> to vector<16x32xf32>
    %22 = arith.addf %19, %21 : vector<16x32xf32>
    %c0_9 = arith.constant 0 : index
    %c0_10 = arith.constant 0 : index
    %23 = vector.load %arg4[%c0_9, %c0_10] : memref<16x32xf32, #tpu.memory_space<vmem>>, vector<16x32xf32>
    tpu.vector_store %arg4[%c0_9, %c0_10], %22 {strides = array<i32>} : memref<16x32xf32, #tpu.memory_space<vmem>>, vector<16x32xf32>,
    return
  }
  func.func @transform_0(%arg0: i32) -> (i32, i32) {
    %c0_i32 = arith.constant 0 : i32
    %c0_i32_0 = arith.constant 0 : i32
    return %arg0, %c0_i32 : i32, i32
  }
  func.func @transform_1(%arg0: i32) -> (i32, i32) {
    %c0_i32 = arith.constant 0 : i32
    %c0_i32_0 = arith.constant 0 : i32
    %c0_i32_1 = arith.constant 0 : i32
    return %c0_i32, %c0_i32_0 : i32, i32
  }
  func.func @transform_2(%arg0: i32) -> (i32, i32) {
    %c0_i32 = arith.constant 0 : i32
    %c0_i32_0 = arith.constant 0 : i32
    %c0_i32_1 = arith.constant 0 : i32
    return %c0_i32, %c0_i32_0 : i32, i32
  }
  func.func @transform_3(%arg0: i32) -> (i32, i32) {
    %c0_i32 = arith.constant 0 : i32
    %c0_i32_0 = arith.constant 0 : i32
    return %arg0, %c0_i32 : i32, i32
  }
}

module attributes {stable_mosaic.version = 11 : i64} {
  func.func @kernel(%arg0: i32, %arg1: memref<64x8xf32, #tpu.memory_space<vmem>>, %arg2: memref<8x32xf32, #tpu.memory_space<vmem>>, %arg3: memref<1x32xf32, #tpu.memory_space<vmem>>, %arg4: memref<64x32xf32, #tpu.memory_space<vmem>>) attributes {dimension_semantics = [#tpu.dimension_semantics<parallel>], iteration_bounds = array<i64: 1>, scalar_prefetch = 0 : i64, scratch_operands = 0 : i64, tpu.core_type = #tpu.core_type<tc>, window_params = [{transform_indices = @transform_0, window_bounds = array<i64: 64, 8>}, {pipeline_mode = #tpu.pipeline_mode<synchronous>, transform_indices = @transform_1, window_bounds = array<i64: 8, 32>}, {pipeline_mode = #tpu.pipeline_mode<synchronous>, transform_indices = @transform_2, window_bounds = array<i64: 1, 32>}, {transform_indices = @transform_3, window_bounds = array<i64: 64, 32>}]} {
    %c0 = arith.constant 0 : index
    %c0_0 = arith.constant 0 : index
    %0 = vector.load %arg1[%c0, %c0_0] : memref<64x8xf32, #tpu.memory_space<vmem>>, vector<64x8xf32>
    %c0_1 = arith.constant 0 : index
    %c0_2 = arith.constant 0 : index
    %1 = vector.load %arg2[%c0_1, %c0_2] : memref<8x32xf32, #tpu.memory_space<vmem>>, vector<8x32xf32>
    %cst = arith.constant dense<0.000000e+00> : vector<64x32xf32>
    %2 = tpu.matmul %0, %1, %cst {dimension_numbers = #tpu.dot_dimension_numbers<[1], [0], [0], [1], [0, 0, 1, 1], [], []>} : vector<64x8xf32>, vector<8x32xf32>, vector<64x32xf32> -> vector<64x32xf32>
    %c0_3 = arith.constant 0 : index
    %c0_4 = arith.constant 0 : index
    %3 = vector.load %arg3[%c0_3, %c0_4] : memref<1x32xf32, #tpu.memory_space<vmem>>, vector<1x32xf32>
    %4 = vector.broadcast %3 : vector<1x32xf32> to vector<64x32xf32>
    %5 = arith.addf %2, %4 : vector<64x32xf32>
    %6 = arith.mulf %5, %5 : vector<64x32xf32>
    %7 = arith.mulf %5, %6 : vector<64x32xf32>
    %cst_5 = arith.constant 4.471500e-02 : f32
    %8 = vector.broadcast %cst_5 : f32 to vector<64x32xf32>
    %9 = arith.mulf %8, %7 : vector<64x32xf32>
    %10 = arith.addf %5, %9 : vector<64x32xf32>
    %cst_6 = arith.constant 0.797884583 : f32
    %11 = vector.broadcast %cst_6 : f32 to vector<64x32xf32>
    %12 = arith.mulf %11, %10 : vector<64x32xf32>
    %13 = math.tanh %12 : vector<64x32xf32>
    %cst_7 = arith.constant 1.000000e+00 : f32
    %14 = vector.broadcast %cst_7 : f32 to vector<64x32xf32>
    %15 = arith.addf %14, %13 : vector<64x32xf32>
    %cst_8 = arith.constant 5.000000e-01 : f32
    %16 = vector.broadcast %cst_8 : f32 to vector<64x32xf32>
    %17 = arith.mulf %16, %15 : vector<64x32xf32>
    %18 = arith.mulf %5, %17 : vector<64x32xf32>
    %c0_9 = arith.constant 0 : index
    %c0_10 = arith.constant 0 : index
    %19 = vector.load %arg4[%c0_9, %c0_10] : memref<64x32xf32, #tpu.memory_space<vmem>>, vector<64x32xf32>
    tpu.vector_store %arg4[%c0_9, %c0_10], %18 {strides = array<i32>} : memref<64x32xf32, #tpu.memory_space<vmem>>, vector<64x32xf32>,
    return
  }
  func.func @transform_0(%arg0: i32) -> (i32, i32) {
    %c0_i32 = arith.constant 0 : i32
    %c0_i32_0 = arith.constant 0 : i32
    return %arg0, %c0_i32 : i32, i32
  }
  func.func @transform_1(%arg0: i32) -> (i32, i32) {
    %c0_i32 = arith.constant 0 : i32
    %c0_i32_0 = arith.constant 0 : i32
    %c0_i32_1 = arith.constant 0 : i32
    return %c0_i32, %c0_i32_0 : i32, i32
  }
  func.func @transform_2(%arg0: i32) -> (i32, i32) {
    %c0_i32 = arith.constant 0 : i32
    %c0_i32_0 = arith.constant 0 : i32
    %c0_i32_1 = arith.constant 0 : i32
    return %c0_i32, %c0_i32_0 : i32, i32
  }
  func.func @transform_3(%arg0: i32) -> (i32, i32) {
    %c0_i32 = arith.constant 0 : i32
    %c0_i32_0 = arith.constant 0 : i32
    return %arg0, %c0_i32 : i32, i32
  }
}

module attributes {stable_mosaic.version = 11 : i64} {
  func.func @kernel(%arg0: i32, %arg1: memref<16x32xf32, #tpu.memory_space<vmem>>, %arg2: memref<32x32xf32, #tpu.memory_space<vmem>>, %arg3: memref<1x32xf32, #tpu.memory_space<vmem>>, %arg4: memref<16x32xf32, #tpu.memory_space<vmem>>) attributes {dimension_semantics = [#tpu.dimension_semantics<parallel>], iteration_bounds = array<i64: 1>, scalar_prefetch = 0 : i64, scratch_operands = 0 : i64, tpu.core_type = #tpu.core_type<tc>, window_params = [{transform_indices = @transform_0, window_bounds = array<i64: 16, 32>}, {pipeline_mode = #tpu.pipeline_mode<synchronous>, transform_indices = @transform_1, window_bounds = array<i64: 32, 32>}, {pipeline_mode = #tpu.pipeline_mode<synchronous>, transform_indices = @transform_2, window_bounds = array<i64: 1, 32>}, {transform_indices = @transform_3, window_bounds = array<i64: 16, 32>}]} {
    %c0 = arith.constant 0 : index
    %c0_0 = arith.constant 0 : index
    %0 = vector.load %arg1[%c0, %c0_0] : memref<16x32xf32, #tpu.memory_space<vmem>>, vector<16x32xf32>
    %c0_1 = arith.constant 0 : index
    %c0_2 = arith.constant 0 : index
    %1 = vector.load %arg2[%c0_1, %c0_2] : memref<32x32xf32, #tpu.memory_space<vmem>>, vector<32x32xf32>
    %cst = arith.constant dense<0.000000e+00> : vector<16x32xf32>
    %2 = tpu.matmul %0, %1, %cst {dimension_numbers = #tpu.dot_dimension_numbers<[1], [0], [0], [1], [0, 0, 1, 1], [], []>} : vector<16x32xf32>, vector<32x32xf32>, vector<16x32xf32> -> vector<16x32xf32>
    %c0_3 = arith.constant 0 : index
    %c0_4 = arith.constant 0 : index
    %3 = vector.load %arg3[%c0_3, %c0_4] : memref<1x32xf32, #tpu.memory_space<vmem>>, vector<1x32xf32>
    %4 = vector.broadcast %3 : vector<1x32xf32> to vector<16x32xf32>
    %5 = arith.addf %2, %4 : vector<16x32xf32>
    %c0_5 = arith.constant 0 : index
    %c0_6 = arith.constant 0 : index
    %6 = vector.load %arg4[%c0_5, %c0_6] : memref<16x32xf32, #tpu.memory_space<vmem>>, vector<16x32xf32>
    tpu.vector_store %arg4[%c0_5, %c0_6], %5 {strides = array<i32>} : memref<16x32xf32, #tpu.memory_space<vmem>>, vector<16x32xf32>,
    return
  }
  func.func @transform_0(%arg0: i32) -> (i32, i32) {
    %c0_i32 = arith.constant 0 : i32
    %c0_i32_0 = arith.constant 0 : i32
    return %arg0, %c0_i32 : i32, i32
  }
  func.func @transform_1(%arg0: i32) -> (i32, i32) {
    %c0_i32 = arith.constant 0 : i32
    %c0_i32_0 = arith.constant 0 : i32
    %c0_i32_1 = arith.constant 0 : i32
    return %c0_i32, %c0_i32_0 : i32, i32
  }
  func.func @transform_2(%arg0: i32) -> (i32, i32) {
    %c0_i32 = arith.constant 0 : i32
    %c0_i32_0 = arith.constant 0 : i32
    %c0_i32_1 = arith.constant 0 : i32
    return %c0_i32, %c0_i32_0 : i32, i32
  }
  func.func @transform_3(%arg0: i32) -> (i32, i32) {
    %c0_i32 = arith.constant 0 : i32
    %c0_i32_0 = arith.constant 0 : i32
    return %arg0, %c0_i32 : i32, i32
  }
}

module attributes {stable_mosaic.version = 11 : i64} {
  func.func @kernel(%arg0: i32, %arg1: memref<8x32xf32, #tpu.memory_space<vmem>>, %arg2: memref<32x8xf32, #tpu.memory_space<vmem>>, %arg3: memref<1x8xf32, #tpu.memory_space<vmem>>, %arg4: memref<8x8xf32, #tpu.memory_space<vmem>>) attributes {dimension_semantics = [#tpu.dimension_semantics<parallel>], iteration_bounds = array<i64: 1>, scalar_prefetch = 0 : i64, scratch_operands = 0 : i64, tpu.core_type = #tpu.core_type<tc>, window_params = [{transform_indices = @transform_0, window_bounds = array<i64: 8, 32>}, {pipeline_mode = #tpu.pipeline_mode<synchronous>, transform_indices = @transform_1, window_bounds = array<i64: 32, 8>}, {pipeline_mode = #tpu.pipeline_mode<synchronous>, transform_indices = @transform_2, window_bounds = array<i64: 1, 8>}, {transform_indices = @transform_3, window_bounds = array<i64: 8, 8>}]} {
    %c0 = arith.constant 0 : index
    %c0_0 = arith.constant 0 : index
    %0 = vector.load %arg1[%c0, %c0_0] : memref<8x32xf32, #tpu.memory_space<vmem>>, vector<8x32xf32>
    %c0_1 = arith.constant 0 : index
    %c0_2 = arith.constant 0 : index
    %1 = vector.load %arg2[%c0_1, %c0_2] : memref<32x8xf32, #tpu.memory_space<vmem>>, vector<32x8xf32>
    %cst = arith.constant dense<0.000000e+00> : vector<8x8xf32>
    %2 = tpu.matmul %0, %1, %cst {dimension_numbers = #tpu.dot_dimension_numbers<[1], [0], [0], [1], [0, 0, 1, 1], [], []>} : vector<8x32xf32>, vector<32x8xf32>, vector<8x8xf32> -> vector<8x8xf32>
    %c0_3 = arith.constant 0 : index
    %c0_4 = arith.constant 0 : index
    %3 = vector.load %arg3[%c0_3, %c0_4] : memref<1x8xf32, #tpu.memory_space<vmem>>, vector<1x8xf32>
    %4 = vector.broadcast %3 : vector<1x8xf32> to vector<8x8xf32>
    %5 = arith.addf %2, %4 : vector<8x8xf32>
    %cst_5 = arith.constant 0.000000e+00 : f32
    %6 = vector.broadcast %cst_5 : f32 to vector<8x8xf32>
    %7 = arith.maximumf %5, %6 : vector<8x8xf32>
    %c0_6 = arith.constant 0 : index
    %c0_7 = arith.constant 0 : index
    %8 = vector.load %arg4[%c0_6, %c0_7] : memref<8x8xf32, #tpu.memory_space<vmem>>, vector<8x8xf32>
    tpu.vector_store %arg4[%c0_6, %c0_7], %7 {strides = array<i32>} : memref<8x8xf32, #tpu.memory_space<vmem>>, vector<8x8xf32>,
    return
  }
  func.func @transform_0(%arg0: i32) -> (i32, i32) {
    %c0_i32 = arith.constant 0 : i32
    %c0_i32_0 = arith.constant 0 : i32
    return %arg0, %c0_i32 : i32, i32
  }
  func.func @transform_1(%arg0: i32) -> (i32, i32) {
    %c0_i32 = arith.constant 0 : i32
    %c0_i32_0 = arith.constant 0 : i32
    %c0_i32_1 = arith.constant 0 : i32
    return %c0_i32, %c0_i32_0 : i32, i32
  }
  func.func @transform_2(%arg0: i32) -> (i32, i32) {
    %c0_i32 = arith.constant 0 : i32
    %c0_i32_0 = arith.constant 0 : i32
    %c0_i32_1 = arith.constant 0 : i32
    return %c0_i32, %c0_i32_0 : i32, i32
  }
  func.func @transform_3(%arg0: i32) -> (i32, i32) {
    %c0_i32 = arith.constant 0 : i32
    %c0_i32_0 = arith.constant 0 : i32
    return %arg0, %c0_i32 : i32, i32
  }
}

module attributes {stable_mosaic.version = 11 : i64} {
  func.func @kernel(%arg0: i32, %arg1: memref<64x32xf32, #tpu.memory_space<vmem>>, %arg2: memref<32x8xf32, #tpu.memory_space<vmem>>, %arg3: memref<1x8xf32, #tpu.memory_space<vmem>>, %arg4: memref<64x8xf32, #tpu.memory_space<vmem>>) attributes {dimension_semantics = [#tpu.dimension_semantics<parallel>], iteration_bounds = array<i64: 1>, scalar_prefetch = 0 : i64, scratch_operands = 0 : i64, tpu.core_type = #tpu.core_type<tc>, window_params = [{transform_indices = @transform_0, window_bounds = array<i64: 64, 32>}, {pipeline_mode = #tpu.pipeline_mode<synchronous>, transform_indices = @transform_1, window_bounds = array<i64: 32, 8>}, {pipeline_mode = #tpu.pipeline_mode<synchronous>, transform_indices = @transform_2, window_bounds = array<i64: 1, 8>}, {transform_indices = @transform_3, window_bounds = array<i64: 64, 8>}]} {
    %c0 = arith.constant 0 : index
    %c0_0 = arith.constant 0 : index
    %0 = vector.load %arg1[%c0, %c0_0] : memref<64x32xf32, #tpu.memory_space<vmem>>, vector<64x32xf32>
    %c0_1 = arith.constant 0 : index
    %c0_2 = arith.constant 0 : index
    %1 = vector.load %arg2[%c0_1, %c0_2] : memref<32x8xf32, #tpu.memory_space<vmem>>, vector<32x8xf32>
    %cst = arith.constant dense<0.000000e+00> : vector<64x8xf32>
    %2 = tpu.matmul %0, %1, %cst {dimension_numbers = #tpu.dot_dimension_numbers<[1], [0], [0], [1], [0, 0, 1, 1], [], []>} : vector<64x32xf32>, vector<32x8xf32>, vector<64x8xf32> -> vector<64x8xf32>
    %c0_3 = arith.constant 0 : index
    %c0_4 = arith.constant 0 : index
    %3 = vector.load %arg3[%c0_3, %c0_4] : memref<1x8xf32, #tpu.memory_space<vmem>>, vector<1x8xf32>
    %4 = vector.broadcast %3 : vector<1x8xf32> to vector<64x8xf32>
    %5 = arith.addf %2, %4 : vector<64x8xf32>
    %c0_5 = arith.constant 0 : index
    %c0_6 = arith.constant 0 : index
    %6 = vector.load %arg4[%c0_5, %c0_6] : memref<64x8xf32, #tpu.memory_space<vmem>>, vector<64x8xf32>
    tpu.vector_store %arg4[%c0_5, %c0_6], %5 {strides = array<i32>} : memref<64x8xf32, #tpu.memory_space<vmem>>, vector<64x8xf32>,
    return
  }
  func.func @transform_0(%arg0: i32) -> (i32, i32) {
    %c0_i32 = arith.constant 0 : i32
    %c0_i32_0 = arith.constant 0 : i32
    return %arg0, %c0_i32 : i32, i32
  }
  func.func @transform_1(%arg0: i32) -> (i32, i32) {
    %c0_i32 = arith.constant 0 : i32
    %c0_i32_0 = arith.constant 0 : i32
    %c0_i32_1 = arith.constant 0 : i32
    return %c0_i32, %c0_i32_0 : i32, i32
  }
  func.func @transform_2(%arg0: i32) -> (i32, i32) {
    %c0_i32 = arith.constant 0 : i32
    %c0_i32_0 = arith.constant 0 : i32
    %c0_i32_1 = arith.constant 0 : i32
    return %c0_i32, %c0_i32_0 : i32, i32
  }
  func.func @transform_3(%arg0: i32) -> (i32, i32) {
    %c0_i32 = arith.constant 0 : i32
    %c0_i32_0 = arith.constant 0 : i32
    return %arg0, %c0_i32 : i32, i32
  }
}

module attributes {stable_mosaic.version = 11 : i64} {
  func.func @kernel(%arg0: i32, %arg1: memref<8x8xf32, #tpu.memory_space<vmem>>, %arg2: memref<8x128xf32, #tpu.memory_space<vmem>>, %arg3: memref<1x128xf32, #tpu.memory_space<vmem>>, %arg4: memref<8x128xf32, #tpu.memory_space<vmem>>) attributes {dimension_semantics = [#tpu.dimension_semantics<parallel>], iteration_bounds = array<i64: 1>, scalar_prefetch = 0 : i64, scratch_operands = 0 : i64, tpu.core_type = #tpu.core_type<tc>, window_params = [{transform_indices = @transform_0, window_bounds = array<i64: 8, 8>}, {pipeline_mode = #tpu.pipeline_mode<synchronous>, transform_indices = @transform_1, window_bounds = array<i64: 8, 128>}, {pipeline_mode = #tpu.pipeline_mode<synchronous>, transform_indices = @transform_2, window_bounds = array<i64: 1, 128>}, {transform_indices = @transform_3, window_bounds = array<i64: 8, 128>}]} {
    %c0 = arith.constant 0 : index
    %c0_0 = arith.constant 0 : index
    %0 = vector.load %arg1[%c0, %c0_0] : memref<8x8xf32, #tpu.memory_space<vmem>>, vector<8x8xf32>
    %c0_1 = arith.constant 0 : index
    %c0_2 = arith.constant 0 : index
    %1 = vector.load %arg2[%c0_1, %c0_2] : memref<8x128xf32, #tpu.memory_space<vmem>>, vector<8x128xf32>
    %cst = arith.constant dense<0.000000e+00> : vector<8x128xf32>
    %2 = tpu.matmul %0, %1, %cst {dimension_numbers = #tpu.dot_dimension_numbers<[1], [0], [0], [1], [0, 0, 1, 1], [], []>} : vector<8x8xf32>, vector<8x128xf32>, vector<8x128xf32> -> vector<8x128xf32>
    %c0_3 = arith.constant 0 : index
    %c0_4 = arith.constant 0 : index
    %3 = vector.load %arg3[%c0_3, %c0_4] : memref<1x128xf32, #tpu.memory_space<vmem>>, vector<1x128xf32>
    %4 = vector.broadcast %3 : vector<1x128xf32> to vector<8x128xf32>
    %5 = arith.addf %2, %4 : vector<8x128xf32>
    %cst_5 = arith.constant 3.000000e+00 : f32
    %6 = vector.broadcast %cst_5 : f32 to vector<8x128xf32>
    %7 = arith.addf %5, %6 : vector<8x128xf32>
    %cst_6 = arith.constant 0.000000e+00 : f32
    %cst_7 = arith.constant 6.000000e+00 : f32
    %8 = vector.broadcast %cst_6 : f32 to vector<8x128xf32>
    %9 = arith.maximumf %8, %7 : vector<8x128xf32>
    %10 = vector.broadcast %cst_7 : f32 to vector<8x128xf32>
    %11 = arith.minimumf %10, %9 : vector<8x128xf32>
    %cst_8 = arith.constant 0.166666672 : f32
    %12 = vector.broadcast %cst_8 : f32 to vector<8x128xf32>
    %13 = arith.mulf %11, %12 : vector<8x128xf32>
    %c0_9 = arith.constant 0 : index
    %c0_10 = arith.constant 0 : index
    %14 = vector.load %arg4[%c0_9, %c0_10] : memref<8x128xf32, #tpu.memory_space<vmem>>, vector<8x128xf32>
    tpu.vector_store %arg4[%c0_9, %c0_10], %13 {strides = array<i32>} : memref<8x128xf32, #tpu.memory_space<vmem>>, vector<8x128xf32>,
    return
  }
  func.func @transform_0(%arg0: i32) -> (i32, i32) {
    %c0_i32 = arith.constant 0 : i32
    %c0_i32_0 = arith.constant 0 : i32
    return %arg0, %c0_i32 : i32, i32
  }
  func.func @transform_1(%arg0: i32) -> (i32, i32) {
    %c0_i32 = arith.constant 0 : i32
    %c0_i32_0 = arith.constant 0 : i32
    %c0_i32_1 = arith.constant 0 : i32
    return %c0_i32, %c0_i32_0 : i32, i32
  }
  func.func @transform_2(%arg0: i32) -> (i32, i32) {
    %c0_i32 = arith.constant 0 : i32
    %c0_i32_0 = arith.constant 0 : i32
    %c0_i32_1 = arith.constant 0 : i32
    return %c0_i32, %c0_i32_0 : i32, i32
  }
  func.func @transform_3(%arg0: i32) -> (i32, i32) {
    %c0_i32 = arith.constant 0 : i32
    %c0_i32_0 = arith.constant 0 : i32
    return %arg0, %c0_i32 : i32, i32
  }
}

module attributes {stable_mosaic.version = 11 : i64} {
  func.func @kernel(%arg0: i32, %arg1: memref<128x16xf32, #tpu.memory_space<vmem>>, %arg2: memref<16x64xf32, #tpu.memory_space<vmem>>, %arg3: memref<1x64xf32, #tpu.memory_space<vmem>>, %arg4: memref<128x64xf32, #tpu.memory_space<vmem>>) attributes {dimension_semantics = [#tpu.dimension_semantics<parallel>], iteration_bounds = array<i64: 1>, scalar_prefetch = 0 : i64, scratch_operands = 0 : i64, tpu.core_type = #tpu.core_type<tc>, window_params = [{transform_indices = @transform_0, window_bounds = array<i64: 128, 16>}, {pipeline_mode = #tpu.pipeline_mode<synchronous>, transform_indices = @transform_1, window_bounds = array<i64: 16, 64>}, {pipeline_mode = #tpu.pipeline_mode<synchronous>, transform_indices = @transform_2, window_bounds = array<i64: 1, 64>}, {transform_indices = @transform_3, window_bounds = array<i64: 128, 64>}]} {
    %c0 = arith.constant 0 : index
    %c0_0 = arith.constant 0 : index
    %0 = vector.load %arg1[%c0, %c0_0] : memref<128x16xf32, #tpu.memory_space<vmem>>, vector<128x16xf32>
    %c0_1 = arith.constant 0 : index
    %c0_2 = arith.constant 0 : index
    %1 = vector.load %arg2[%c0_1, %c0_2] : memref<16x64xf32, #tpu.memory_space<vmem>>, vector<16x64xf32>
    %cst = arith.constant dense<0.000000e+00> : vector<128x64xf32>
    %2 = tpu.matmul %0, %1, %cst {dimension_numbers = #tpu.dot_dimension_numbers<[1], [0], [0], [1], [0, 0, 1, 1], [], []>} : vector<128x16xf32>, vector<16x64xf32>, vector<128x64xf32> -> vector<128x64xf32>
    %c0_3 = arith.constant 0 : index
    %c0_4 = arith.constant 0 : index
    %3 = vector.load %arg3[%c0_3, %c0_4] : memref<1x64xf32, #tpu.memory_space<vmem>>, vector<1x64xf32>
    %4 = vector.broadcast %3 : vector<1x64xf32> to vector<128x64xf32>
    %5 = arith.addf %2, %4 : vector<128x64xf32>
    %c0_5 = arith.constant 0 : index
    %c0_6 = arith.constant 0 : index
    %6 = vector.load %arg4[%c0_5, %c0_6] : memref<128x64xf32, #tpu.memory_space<vmem>>, vector<128x64xf32>
    tpu.vector_store %arg4[%c0_5, %c0_6], %5 {strides = array<i32>} : memref<128x64xf32, #tpu.memory_space<vmem>>, vector<128x64xf32>,
    return
  }
  func.func @transform_0(%arg0: i32) -> (i32, i32) {
    %c0_i32 = arith.constant 0 : i32
    %c0_i32_0 = arith.constant 0 : i32
    return %arg0, %c0_i32 : i32, i32
  }
  func.func @transform_1(%arg0: i32) -> (i32, i32) {
    %c0_i32 = arith.constant 0 : i32
    %c0_i32_0 = arith.constant 0 : i32
    %c0_i32_1 = arith.constant 0 : i32
    return %c0_i32, %c0_i32_0 : i32, i32
  }
  func.func @transform_2(%arg0: i32) -> (i32, i32) {
    %c0_i32 = arith.constant 0 : i32
    %c0_i32_0 = arith.constant 0 : i32
    %c0_i32_1 = arith.constant 0 : i32
    return %c0_i32, %c0_i32_0 : i32, i32
  }
  func.func @transform_3(%arg0: i32) -> (i32, i32) {
    %c0_i32 = arith.constant 0 : i32
    %c0_i32_0 = arith.constant 0 : i32
    return %arg0, %c0_i32 : i32, i32
  }
}

module attributes {stable_mosaic.version = 11 : i64} {
  func.func @kernel(%arg0: i32, %arg1: memref<128x64xf32, #tpu.memory_space<vmem>>, %arg2: memref<64x16xf32, #tpu.memory_space<vmem>>, %arg3: memref<1x16xf32, #tpu.memory_space<vmem>>, %arg4: memref<128x16xf32, #tpu.memory_space<vmem>>) attributes {dimension_semantics = [#tpu.dimension_semantics<parallel>], iteration_bounds = array<i64: 1>, scalar_prefetch = 0 : i64, scratch_operands = 0 : i64, tpu.core_type = #tpu.core_type<tc>, window_params = [{transform_indices = @transform_0, window_bounds = array<i64: 128, 64>}, {pipeline_mode = #tpu.pipeline_mode<synchronous>, transform_indices = @transform_1, window_bounds = array<i64: 64, 16>}, {pipeline_mode = #tpu.pipeline_mode<synchronous>, transform_indices = @transform_2, window_bounds = array<i64: 1, 16>}, {transform_indices = @transform_3, window_bounds = array<i64: 128, 16>}]} {
    %c0 = arith.constant 0 : index
    %c0_0 = arith.constant 0 : index
    %0 = vector.load %arg1[%c0, %c0_0] : memref<128x64xf32, #tpu.memory_space<vmem>>, vector<128x64xf32>
    %c0_1 = arith.constant 0 : index
    %c0_2 = arith.constant 0 : index
    %1 = vector.load %arg2[%c0_1, %c0_2] : memref<64x16xf32, #tpu.memory_space<vmem>>, vector<64x16xf32>
    %cst = arith.constant dense<0.000000e+00> : vector<128x16xf32>
    %2 = tpu.matmul %0, %1, %cst {dimension_numbers = #tpu.dot_dimension_numbers<[1], [0], [0], [1], [0, 0, 1, 1], [], []>} : vector<128x64xf32>, vector<64x16xf32>, vector<128x16xf32> -> vector<128x16xf32>
    %c0_3 = arith.constant 0 : index
    %c0_4 = arith.constant 0 : index
    %3 = vector.load %arg3[%c0_3, %c0_4] : memref<1x16xf32, #tpu.memory_space<vmem>>, vector<1x16xf32>
    %4 = vector.broadcast %3 : vector<1x16xf32> to vector<128x16xf32>
    %5 = arith.addf %2, %4 : vector<128x16xf32>
    %c0_5 = arith.constant 0 : index
    %c0_6 = arith.constant 0 : index
    %6 = vector.load %arg4[%c0_5, %c0_6] : memref<128x16xf32, #tpu.memory_space<vmem>>, vector<128x16xf32>
    tpu.vector_store %arg4[%c0_5, %c0_6], %5 {strides = array<i32>} : memref<128x16xf32, #tpu.memory_space<vmem>>, vector<128x16xf32>,
    return
  }
  func.func @transform_0(%arg0: i32) -> (i32, i32) {
    %c0_i32 = arith.constant 0 : i32
    %c0_i32_0 = arith.constant 0 : i32
    return %arg0, %c0_i32 : i32, i32
  }
  func.func @transform_1(%arg0: i32) -> (i32, i32) {
    %c0_i32 = arith.constant 0 : i32
    %c0_i32_0 = arith.constant 0 : i32
    %c0_i32_1 = arith.constant 0 : i32
    return %c0_i32, %c0_i32_0 : i32, i32
  }
  func.func @transform_2(%arg0: i32) -> (i32, i32) {
    %c0_i32 = arith.constant 0 : i32
    %c0_i32_0 = arith.constant 0 : i32
    %c0_i32_1 = arith.constant 0 : i32
    return %c0_i32, %c0_i32_0 : i32, i32
  }
  func.func @transform_3(%arg0: i32) -> (i32, i32) {
    %c0_i32 = arith.constant 0 : i32
    %c0_i32_0 = arith.constant 0 : i32
    return %arg0, %c0_i32 : i32, i32
  }
}

module attributes {stable_mosaic.version = 11 : i64} {
  func.func @kernel(%arg0: i32, %arg1: memref<16x32xf32, #tpu.memory_space<vmem>>, %arg2: memref<32x16xf32, #tpu.memory_space<vmem>>, %arg3: memref<1x16xf32, #tpu.memory_space<vmem>>, %arg4: memref<16x16xf32, #tpu.memory_space<vmem>>) attributes {dimension_semantics = [#tpu.dimension_semantics<parallel>], iteration_bounds = array<i64: 1>, scalar_prefetch = 0 : i64, scratch_operands = 0 : i64, tpu.core_type = #tpu.core_type<tc>, window_params = [{transform_indices = @transform_0, window_bounds = array<i64: 16, 32>}, {pipeline_mode = #tpu.pipeline_mode<synchronous>, transform_indices = @transform_1, window_bounds = array<i64: 32, 16>}, {pipeline_mode = #tpu.pipeline_mode<synchronous>, transform_indices = @transform_2, window_bounds = array<i64: 1, 16>}, {transform_indices = @transform_3, window_bounds = array<i64: 16, 16>}]} {
    %c0 = arith.constant 0 : index
    %c0_0 = arith.constant 0 : index
    %0 = vector.load %arg1[%c0, %c0_0] : memref<16x32xf32, #tpu.memory_space<vmem>>, vector<16x32xf32>
    %c0_1 = arith.constant 0 : index
    %c0_2 = arith.constant 0 : index
    %1 = vector.load %arg2[%c0_1, %c0_2] : memref<32x16xf32, #tpu.memory_space<vmem>>, vector<32x16xf32>
    %cst = arith.constant dense<0.000000e+00> : vector<16x16xf32>
    %2 = tpu.matmul %0, %1, %cst {dimension_numbers = #tpu.dot_dimension_numbers<[1], [0], [0], [1], [0, 0, 1, 1], [], []>} : vector<16x32xf32>, vector<32x16xf32>, vector<16x16xf32> -> vector<16x16xf32>
    %c0_3 = arith.constant 0 : index
    %c0_4 = arith.constant 0 : index
    %3 = vector.load %arg3[%c0_3, %c0_4] : memref<1x16xf32, #tpu.memory_space<vmem>>, vector<1x16xf32>
    %4 = vector.broadcast %3 : vector<1x16xf32> to vector<16x16xf32>
    %5 = arith.addf %2, %4 : vector<16x16xf32>
    %c0_5 = arith.constant 0 : index
    %c0_6 = arith.constant 0 : index
    %6 = vector.load %arg4[%c0_5, %c0_6] : memref<16x16xf32, #tpu.memory_space<vmem>>, vector<16x16xf32>
    tpu.vector_store %arg4[%c0_5, %c0_6], %5 {strides = array<i32>} : memref<16x16xf32, #tpu.memory_space<vmem>>, vector<16x16xf32>,
    return
  }
  func.func @transform_0(%arg0: i32) -> (i32, i32) {
    %c0_i32 = arith.constant 0 : i32
    %c0_i32_0 = arith.constant 0 : i32
    return %arg0, %c0_i32 : i32, i32
  }
  func.func @transform_1(%arg0: i32) -> (i32, i32) {
    %c0_i32 = arith.constant 0 : i32
    %c0_i32_0 = arith.constant 0 : i32
    %c0_i32_1 = arith.constant 0 : i32
    return %c0_i32, %c0_i32_0 : i32, i32
  }
  func.func @transform_2(%arg0: i32) -> (i32, i32) {
    %c0_i32 = arith.constant 0 : i32
    %c0_i32_0 = arith.constant 0 : i32
    %c0_i32_1 = arith.constant 0 : i32
    return %c0_i32, %c0_i32_0 : i32, i32
  }
  func.func @transform_3(%arg0: i32) -> (i32, i32) {
    %c0_i32 = arith.constant 0 : i32
    %c0_i32_0 = arith.constant 0 : i32
    return %arg0, %c0_i32 : i32, i32
  }
}

module attributes {stable_mosaic.version = 11 : i64} {
  func.func @kernel(%arg0: i32, %arg1: memref<32x8xf32, #tpu.memory_space<vmem>>, %arg2: memref<8x64xf32, #tpu.memory_space<vmem>>, %arg3: memref<1x64xf32, #tpu.memory_space<vmem>>, %arg4: memref<32x64xf32, #tpu.memory_space<vmem>>) attributes {dimension_semantics = [#tpu.dimension_semantics<parallel>], iteration_bounds = array<i64: 1>, scalar_prefetch = 0 : i64, scratch_operands = 0 : i64, tpu.core_type = #tpu.core_type<tc>, window_params = [{transform_indices = @transform_0, window_bounds = array<i64: 32, 8>}, {pipeline_mode = #tpu.pipeline_mode<synchronous>, transform_indices = @transform_1, window_bounds = array<i64: 8, 64>}, {pipeline_mode = #tpu.pipeline_mode<synchronous>, transform_indices = @transform_2, window_bounds = array<i64: 1, 64>}, {transform_indices = @transform_3, window_bounds = array<i64: 32, 64>}]} {
    %c0 = arith.constant 0 : index
    %c0_0 = arith.constant 0 : index
    %0 = vector.load %arg1[%c0, %c0_0] : memref<32x8xf32, #tpu.memory_space<vmem>>, vector<32x8xf32>
    %c0_1 = arith.constant 0 : index
    %c0_2 = arith.constant 0 : index
    %1 = vector.load %arg2[%c0_1, %c0_2] : memref<8x64xf32, #tpu.memory_space<vmem>>, vector<8x64xf32>
    %cst = arith.constant dense<0.000000e+00> : vector<32x64xf32>
    %2 = tpu.matmul %0, %1, %cst {dimension_numbers = #tpu.dot_dimension_numbers<[1], [0], [0], [1], [0, 0, 1, 1], [], []>} : vector<32x8xf32>, vector<8x64xf32>, vector<32x64xf32> -> vector<32x64xf32>
    %c0_3 = arith.constant 0 : index
    %c0_4 = arith.constant 0 : index
    %3 = vector.load %arg3[%c0_3, %c0_4] : memref<1x64xf32, #tpu.memory_space<vmem>>, vector<1x64xf32>
    %4 = vector.broadcast %3 : vector<1x64xf32> to vector<32x64xf32>
    %5 = arith.addf %2, %4 : vector<32x64xf32>
    %c0_5 = arith.constant 0 : index
    %c0_6 = arith.constant 0 : index
    %6 = vector.load %arg4[%c0_5, %c0_6] : memref<32x64xf32, #tpu.memory_space<vmem>>, vector<32x64xf32>
    tpu.vector_store %arg4[%c0_5, %c0_6], %5 {strides = array<i32>} : memref<32x64xf32, #tpu.memory_space<vmem>>, vector<32x64xf32>,
    return
  }
  func.func @transform_0(%arg0: i32) -> (i32, i32) {
    %c0_i32 = arith.constant 0 : i32
    %c0_i32_0 = arith.constant 0 : i32
    return %arg0, %c0_i32 : i32, i32
  }
  func.func @transform_1(%arg0: i32) -> (i32, i32) {
    %c0_i32 = arith.constant 0 : i32
    %c0_i32_0 = arith.constant 0 : i32
    %c0_i32_1 = arith.constant 0 : i32
    return %c0_i32, %c0_i32_0 : i32, i32
  }
  func.func @transform_2(%arg0: i32) -> (i32, i32) {
    %c0_i32 = arith.constant 0 : i32
    %c0_i32_0 = arith.constant 0 : i32
    %c0_i32_1 = arith.constant 0 : i32
    return %c0_i32, %c0_i32_0 : i32, i32
  }
  func.func @transform_3(%arg0: i32) -> (i32, i32) {
    %c0_i32 = arith.constant 0 : i32
    %c0_i32_0 = arith.constant 0 : i32
    return %arg0, %c0_i32 : i32, i32
  }
}

</mosaic_0001>

<llo_original>
// kernel: dna_block_forward.16
$region0: #{dna_block_forward.16}
  #allocation0 [shape = 'u32[]', space=smem, size = 0x4, offset = 0x4, fixed_abs, tag = 'smem constant byte address 0x4 - core index']
  #allocation1 [shape = 'u32[144,128]{1,0:T(1,128)}', space=vmem, size = 0x12000, scoped, tag = 'internal scratch']
  %s0 = inlined_call_operand.vmem [shape: f32[16,16], index: 0, kind: input, shape index: {}]
  %s1 = inlined_call_operand.vmem [shape: f32[16,32], index: 1, kind: input, shape index: {}]
  %s2 = inlined_call_operand.vmem [shape: f32[1,32], index: 2, kind: input, shape index: {}]
  %s3 = inlined_call_operand.vmem [shape: f32[16,32], index: 3, kind: output, shape index: {}]
  %s4 = sld [smem:[#allocation0]]
  $region22: #{dna_block_forward.16} parent=0
    _
  %s6 = ssub.s32 1, %s4
  %s7 = scalar_select 0, %s6, %s4
  // Predicated region
  $region2: #{dna_block_forward.16} parent=0 // pred_check
    _
  $region3: #{dna_block_forward.16} parent=0 // pred_check_branch
    %9 = sbr.rel (0) target = $region5
  $region4: #{dna_block_forward.16} parent=0 // pred_region
    _
  $region5: #{dna_block_forward.16} parent=0 // pred_fallthru
    _
  // Predicated region
  $region6: #{dna_block_forward.16} parent=0 // pred_check
    _
  $region7: #{dna_block_forward.16} parent=0 // pred_check_branch
    %11 = sbr.rel (0) target = $region9
  $region8: #{dna_block_forward.16} parent=0 // pred_region
    _
  $region9: #{dna_block_forward.16} parent=0 // pred_fallthru
    _
  // Predicated region
  $region10: #{dna_block_forward.16} parent=0 // pred_check
    _
  $region11: #{dna_block_forward.16} parent=0 // pred_check_branch
    %13 = sbr.rel (0) target = $region13
  $region12: #{dna_block_forward.16} parent=0 // pred_region
    _
  $region13: #{dna_block_forward.16} parent=0 // pred_fallthru
    _
  %v14 = vld [vmem:[%s0] sm:$0xff]
  %v15 = vld [vmem:[%s0 + $0x8] sm:$0xff]
  %v16 = vld [vmem:[%s1] sm:$0xff]
  %v17 = vld [vmem:[%s1 + $0x8] sm:$0xff]
  %v18 = vld [vmem:[%s2] sm:$0x1]
  %v20 = vlaneseq
  %v21 = vshrl.u32 %v20, 7
  %v22 = vsub.s32 0, %v21
  %v23 = vrot.slane %v18, %v22
  %vm25 = vcmask 130048
  %v27 = vsel %vm25, %v14, 0
  %v30 = vsel %vm25, %v15, 0
  %32 = vmatprep.subr.mxu0 0.0
  %33 = vmatpush1.msra.mxu0 0.0
  %34 = vmatprep.subr.mxu0 0.0
  %35 = vmatpush1.msra.mxu0 0.0
  %36 = vmatprep.subr.mxu0 0.0
  %37 = vmatpush1.msra.mxu0 0.0
  %38 = vmatprep.subr.mxu0 0.0
  %39 = vmatpush1.msra.mxu0 0.0
  %40 = vmatprep.subr.mxu0 0.0
  %41 = vmatpush1.msra.mxu0 0.0
  %42 = vmatprep.subr.mxu0 0.0
  %43 = vmatpush1.msra.mxu0 0.0
  %44 = vmatprep.subr.mxu0 0.0
  %45 = vmatpush1.msra.mxu0 0.0
  %46 = vmatprep.subr.mxu0 0.0
  %47 = vmatpush1.msra.mxu0 0.0
  %48 = vmatprep.subr.mxu0 0.0
  %49 = vmatpush1.msra.mxu0 0.0
  %50 = vmatprep.subr.mxu0 0.0
  %51 = vmatpush1.msra.mxu0 0.0
  %52 = vmatprep.subr.mxu0 0.0
  %53 = vmatpush1.msra.mxu0 0.0
  %54 = vmatprep.subr.mxu0 0.0
  %55 = vmatpush1.msra.mxu0 0.0
  %56 = vmatprep.subr.mxu0 0.0
  %57 = vmatpush1.msra.mxu0 0.0
  %58 = vmatprep.subr.mxu0 0.0
  %59 = vmatpush1.msra.mxu0 0.0
  %60 = vmatprep.subr.mxu0 0.0
  %61 = vmatpush1.msra.mxu0 %v17
  %62 = vmatprep.subr.mxu0 0.0
  %63 = vmatpush1.msra.mxu0 %v16
  %64 = vmatprep.subr.mxu0 0.0
  %65 = vmatpush2.msra.mxu0 0.0
  %66 = vmatprep.subr.mxu0 0.0
  %67 = vmatpush2.msra.mxu0 0.0
  %68 = vmatprep.subr.mxu0 0.0
  %69 = vmatpush2.msra.mxu0 0.0
  %70 = vmatprep.subr.mxu0 0.0
  %71 = vmatpush2.msra.mxu0 0.0
  %72 = vmatprep.subr.mxu0 0.0
  %73 = vmatpush2.msra.mxu0 0.0
  %74 = vmatprep.subr.mxu0 0.0
  %75 = vmatpush2.msra.mxu0 0.0
  %76 = vmatprep.subr.mxu0 0.0
  %77 = vmatpush2.msra.mxu0 0.0
  %78 = vmatprep.subr.mxu0 0.0
  %79 = vmatpush2.msra.mxu0 0.0
  %80 = vmatprep.subr.mxu0 0.0
  %81 = vmatpush2.msra.mxu0 0.0
  %82 = vmatprep.subr.mxu0 0.0
  %83 = vmatpush2.msra.mxu0 0.0
  %84 = vmatprep.subr.mxu0 0.0
  %85 = vmatpush2.msra.mxu0 0.0
  %86 = vmatprep.subr.mxu0 0.0
  %87 = vmatpush2.msra.mxu0 0.0
  %88 = vmatprep.subr.mxu0 0.0
  %89 = vmatpush2.msra.mxu0 0.0
  %90 = vmatprep.subr.mxu0 0.0
  %91 = vmatpush2.msra.mxu0 0.0
  %92 = vmatprep.subr.mxu0 0.0
  %93 = vmatpush2.msra.mxu0 0.0
  %94 = vmatprep.subr.mxu0 0.0
  %95 = vmatpush2.msra.mxu0 0.0
  %96 = vmatprep.mubr.f32.mxu0 0.0
  %97 = vmatmul.mubr.f32.gmra.mxu0 %v27
  %v98 = vpop.f32.mrf.mxu0
  %v99 = vadd.f32 %v23, %v98
  %v100 = vpop.f32.mrf.mxu0
  %101 = vmatprep.mubr.f32.mxu0 0.0
  %102 = vmatmul.mubr.f32.gmra.mxu0 %v30
  %v103 = vpop.f32.mrf.mxu0
  %v104 = vadd.f32 %v23, %v103
  %v105 = vpop.f32.mrf.mxu0
  %106 = vdwg.mxu0
  %vm107 = vcmask 261120
  %108 = vst.msk [vmem:[%s3] sm:$0xff] %vm107, %v99
  %109 = vst.msk [vmem:[%s3 + $0x8] sm:$0xff] %vm107, %v104
  // Predicated region
  $region14: #{dna_block_forward.16} parent=0 // pred_check
    _
  $region15: #{dna_block_forward.16} parent=0 // pred_check_branch
    %111 = sbr.rel (0) target = $region17
  $region16: #{dna_block_forward.16} parent=0 // pred_region
    _
  $region17: #{dna_block_forward.16} parent=0 // pred_fallthru
    _
  // Predicated region
  $region18: #{dna_block_forward.16} parent=0 // pred_check
    _
  $region19: #{dna_block_forward.16} parent=0 // pred_check_branch
    %113 = sbr.rel (0) target = $region21
  $region20: #{dna_block_forward.16} parent=0 // pred_region
    _
  $region21: #{dna_block_forward.16} parent=0 // pred_fallthru
    _

// kernel: dna_block_forward.17
$region0: #{dna_block_forward.17}
  #allocation0 [shape = 'u32[]', space=smem, size = 0x4, offset = 0x4, fixed_abs, tag = 'smem constant byte address 0x4 - core index']
  #allocation1 [shape = 'u32[144,128]{1,0:T(1,128)}', space=vmem, size = 0x12000, scoped, tag = 'internal scratch']
  %s0 = inlined_call_operand.vmem [shape: f32[16,32], index: 0, kind: input, shape index: {}]
  %s1 = inlined_call_operand.vmem [shape: f32[1,32], index: 1, kind: input, shape index: {}]
  %s2 = inlined_call_operand.vmem [shape: f32[1,32], index: 2, kind: input, shape index: {}]
  %s3 = inlined_call_operand.vmem [shape: f32[16,32], index: 3, kind: output, shape index: {}]
  %s4 = sld [smem:[#allocation0]]
  $region22: #{dna_block_forward.17} parent=0
    _
  %s6 = ssub.s32 1, %s4
  %s7 = scalar_select 0, %s6, %s4
  // Predicated region
  $region2: #{dna_block_forward.17} parent=0 // pred_check
    _
  $region3: #{dna_block_forward.17} parent=0 // pred_check_branch
    %9 = sbr.rel (0) target = $region5
  $region4: #{dna_block_forward.17} parent=0 // pred_region
    _
  $region5: #{dna_block_forward.17} parent=0 // pred_fallthru
    _
  // Predicated region
  $region6: #{dna_block_forward.17} parent=0 // pred_check
    _
  $region7: #{dna_block_forward.17} parent=0 // pred_check_branch
    %11 = sbr.rel (0) target = $region9
  $region8: #{dna_block_forward.17} parent=0 // pred_region
    _
  $region9: #{dna_block_forward.17} parent=0 // pred_fallthru
    _
  // Predicated region
  $region10: #{dna_block_forward.17} parent=0 // pred_check
    _
  $region11: #{dna_block_forward.17} parent=0 // pred_check_branch
    %13 = sbr.rel (0) target = $region13
  $region12: #{dna_block_forward.17} parent=0 // pred_region
    _
  $region13: #{dna_block_forward.17} parent=0 // pred_fallthru
    _
  %v14 = vld [vmem:[%s0] sm:$0xff]
  %v15 = vld [vmem:[%s0 + $0x8] sm:$0xff]
  %vm16 = vcmask 261120
  %v17 = vsel %vm16, %v14, 0.0
  %18 = vadd.xlane.f32.xlu0 %v17
  %v19 = vpop.xlane.xlu0 %18
  %v20 = vsel %vm16, %v15, 0.0
  %21 = vadd.xlane.f32.xlu0 %v20
  %v22 = vpop.xlane.xlu0 %21
  %v23 = vrcp.pop 32.0
  %v24 = vmul.f32 %v19, %v23
  %v25 = vmul.f32 %v22, %v23
  %v26 = vsub.f32 %v14, %v24
  %v27 = vsub.f32 %v15, %v25
  %v28 = vmul.f32 %v26, %v26
  %v29 = vmul.f32 %v27, %v27
  %v30 = vsel %vm16, %v28, 0.0
  %31 = vadd.xlane.f32.xlu0 %v30
  %v32 = vpop.xlane.xlu0 %31
  %v33 = vsel %vm16, %v29, 0.0
  %34 = vadd.xlane.f32.xlu0 %v33
  %v35 = vpop.xlane.xlu0 %34
  %v36 = vmul.f32 %v32, %v23
  %v37 = vmul.f32 %v35, %v23
  %v38 = vadd.f32 %v36, 1e-05
  %v39 = vadd.f32 %v37, 1e-05
  %v40 = vrsqrt.pop %v38
  %v41 = vrsqrt.pop %v39
  %v42 = vmul.f32 %v26, %v40
  %v43 = vmul.f32 %v27, %v41
  %v44 = vld [vmem:[%s1] sm:$0x1]
  %v46 = vlaneseq
  %v47 = vshrl.u32 %v46, 7
  %v48 = vsub.s32 0, %v47
  %v49 = vrot.slane %v44, %v48
  %v51 = vmul.f32 %v42, %v49
  %v52 = vmul.f32 %v43, %v49
  %v53 = vld [vmem:[%s2] sm:$0x1]
  %v55 = vlaneseq
  %v56 = vshrl.u32 %v55, 7
  %v57 = vsub.s32 0, %v56
  %v58 = vrot.slane %v53, %v57
  %v60 = vadd.f32 %v51, %v58
  %v61 = vadd.f32 %v52, %v58
  %62 = vst.msk [vmem:[%s3] sm:$0xff] %vm16, %v60
  %63 = vst.msk [vmem:[%s3 + $0x8] sm:$0xff] %vm16, %v61
  // Predicated region
  $region14: #{dna_block_forward.17} parent=0 // pred_check
    _
  $region15: #{dna_block_forward.17} parent=0 // pred_check_branch
    %65 = sbr.rel (0) target = $region17
  $region16: #{dna_block_forward.17} parent=0 // pred_region
    _
  $region17: #{dna_block_forward.17} parent=0 // pred_fallthru
    _
  // Predicated region
  $region18: #{dna_block_forward.17} parent=0 // pred_check
    _
  $region19: #{dna_block_forward.17} parent=0 // pred_check_branch
    %67 = sbr.rel (0) target = $region21
  $region20: #{dna_block_forward.17} parent=0 // pred_region
    _
  $region21: #{dna_block_forward.17} parent=0 // pred_fallthru
    _

// kernel: dna_block_forward.15
$region0: #{dna_block_forward.15}
  #allocation0 [shape = 'u32[]', space=smem, size = 0x4, offset = 0x4, fixed_abs, tag = 'smem constant byte address 0x4 - core index']
  #allocation1 [shape = 'u32[144,128]{1,0:T(1,128)}', space=vmem, size = 0x12000, scoped, tag = 'internal scratch']
  %s0 = inlined_call_operand.vmem [shape: f32[32,64], index: 0, kind: input, shape index: {}]
  %s1 = inlined_call_operand.vmem [shape: f32[64,8], index: 1, kind: input, shape index: {}]
  %s2 = inlined_call_operand.vmem [shape: f32[1,8], index: 2, kind: input, shape index: {}]
  %s3 = inlined_call_operand.vmem [shape: f32[32,8], index: 3, kind: output, shape index: {}]
  %s4 = sld [smem:[#allocation0]]
  $region22: #{dna_block_forward.15} parent=0
    _
  %s6 = ssub.s32 1, %s4
  %s7 = scalar_select 0, %s6, %s4
  // Predicated region
  $region2: #{dna_block_forward.15} parent=0 // pred_check
    _
  $region3: #{dna_block_forward.15} parent=0 // pred_check_branch
    %9 = sbr.rel (0) target = $region5
  $region4: #{dna_block_forward.15} parent=0 // pred_region
    _
  $region5: #{dna_block_forward.15} parent=0 // pred_fallthru
    _
  // Predicated region
  $region6: #{dna_block_forward.15} parent=0 // pred_check
    _
  $region7: #{dna_block_forward.15} parent=0 // pred_check_branch
    %11 = sbr.rel (0) target = $region9
  $region8: #{dna_block_forward.15} parent=0 // pred_region
    _
  $region9: #{dna_block_forward.15} parent=0 // pred_fallthru
    _
  // Predicated region
  $region10: #{dna_block_forward.15} parent=0 // pred_check
    _
  $region11: #{dna_block_forward.15} parent=0 // pred_check_branch
    %13 = sbr.rel (0) target = $region13
  $region12: #{dna_block_forward.15} parent=0 // pred_region
    _
  $region13: #{dna_block_forward.15} parent=0 // pred_fallthru
    _
  %v14 = vld [vmem:[%s0] sm:$0xff]
  %v15 = vld [vmem:[%s0 + $0x8] sm:$0xff]
  %v16 = vld [vmem:[%s0 + $0x10] sm:$0xff]
  %v17 = vld [vmem:[%s0 + $0x18] sm:$0xff]
  %v18 = vld [vmem:[%s1] sm:$0xff]
  %v19 = vld [vmem:[%s1 + $0x8] sm:$0xff]
  %v20 = vld [vmem:[%s1 + $0x10] sm:$0xff]
  %v21 = vld [vmem:[%s1 + $0x18] sm:$0xff]
  %v22 = vld [vmem:[%s1 + $0x20] sm:$0xff]
  %v23 = vld [vmem:[%s1 + $0x28] sm:$0xff]
  %v24 = vld [vmem:[%s1 + $0x30] sm:$0xff]
  %v25 = vld [vmem:[%s1 + $0x38] sm:$0xff]
  %v26 = vld [vmem:[%s2] sm:$0x1]
  %v28 = vlaneseq
  %v29 = vshrl.u32 %v28, 7
  %v30 = vsub.s32 0, %v29
  %v31 = vrot.slane %v26, %v30
  %vm33 = vcmask 523264
  %v35 = vsel %vm33, %v14, 0
  %v38 = vsel %vm33, %v15, 0
  %v41 = vsel %vm33, %v16, 0
  %v44 = vsel %vm33, %v17, 0
  %46 = vmatprep.subr.mxu0 0.0
  %47 = vmatpush1.msra.mxu0 0.0
  %48 = vmatprep.subr.mxu0 0.0
  %49 = vmatpush1.msra.mxu0 0.0
  %50 = vmatprep.subr.mxu0 0.0
  %51 = vmatpush1.msra.mxu0 0.0
  %52 = vmatprep.subr.mxu0 0.0
  %53 = vmatpush1.msra.mxu0 0.0
  %54 = vmatprep.subr.mxu0 0.0
  %55 = vmatpush1.msra.mxu0 0.0
  %56 = vmatprep.subr.mxu0 0.0
  %57 = vmatpush1.msra.mxu0 0.0
  %58 = vmatprep.subr.mxu0 0.0
  %59 = vmatpush1.msra.mxu0 0.0
  %60 = vmatprep.subr.mxu0 0.0
  %61 = vmatpush1.msra.mxu0 0.0
  %62 = vmatprep.subr.mxu0 0.0
  %63 = vmatpush1.msra.mxu0 %v25
  %64 = vmatprep.subr.mxu0 0.0
  %65 = vmatpush1.msra.mxu0 %v24
  %66 = vmatprep.subr.mxu0 0.0
  %67 = vmatpush1.msra.mxu0 %v23
  %68 = vmatprep.subr.mxu0 0.0
  %69 = vmatpush1.msra.mxu0 %v22
  %70 = vmatprep.subr.mxu0 0.0
  %71 = vmatpush1.msra.mxu0 %v21
  %72 = vmatprep.subr.mxu0 0.0
  %73 = vmatpush1.msra.mxu0 %v20
  %74 = vmatprep.subr.mxu0 0.0
  %75 = vmatpush1.msra.mxu0 %v19
  %76 = vmatprep.subr.mxu0 0.0
  %77 = vmatpush1.msra.mxu0 %v18
  %78 = vmatprep.subr.mxu0 0.0
  %79 = vmatpush2.msra.mxu0 0.0
  %80 = vmatprep.subr.mxu0 0.0
  %81 = vmatpush2.msra.mxu0 0.0
  %82 = vmatprep.subr.mxu0 0.0
  %83 = vmatpush2.msra.mxu0 0.0
  %84 = vmatprep.subr.mxu0 0.0
  %85 = vmatpush2.msra.mxu0 0.0
  %86 = vmatprep.subr.mxu0 0.0
  %87 = vmatpush2.msra.mxu0 0.0
  %88 = vmatprep.subr.mxu0 0.0
  %89 = vmatpush2.msra.mxu0 0.0
  %90 = vmatprep.subr.mxu0 0.0
  %91 = vmatpush2.msra.mxu0 0.0
  %92 = vmatprep.subr.mxu0 0.0
  %93 = vmatpush2.msra.mxu0 0.0
  %94 = vmatprep.subr.mxu0 0.0
  %95 = vmatpush2.msra.mxu0 0.0
  %96 = vmatprep.subr.mxu0 0.0
  %97 = vmatpush2.msra.mxu0 0.0
  %98 = vmatprep.subr.mxu0 0.0
  %99 = vmatpush2.msra.mxu0 0.0
  %100 = vmatprep.subr.mxu0 0.0
  %101 = vmatpush2.msra.mxu0 0.0
  %102 = vmatprep.subr.mxu0 0.0
  %103 = vmatpush2.msra.mxu0 0.0
  %104 = vmatprep.subr.mxu0 0.0
  %105 = vmatpush2.msra.mxu0 0.0
  %106 = vmatprep.subr.mxu0 0.0
  %107 = vmatpush2.msra.mxu0 0.0
  %108 = vmatprep.subr.mxu0 0.0
  %109 = vmatpush2.msra.mxu0 0.0
  %110 = vmatprep.mubr.f32.mxu0 0.0
  %111 = vmatmul.mubr.f32.gmra.mxu0 %v35
  %v112 = vpop.f32.mrf.mxu0
  %v113 = vadd.f32 %v31, %v112
  %v114 = vpop.f32.mrf.mxu0
  %115 = vmatprep.mubr.f32.mxu0 0.0
  %116 = vmatmul.mubr.f32.gmra.mxu0 %v38
  %v117 = vpop.f32.mrf.mxu0
  %v118 = vadd.f32 %v31, %v117
  %v119 = vpop.f32.mrf.mxu0
  %120 = vmatprep.mubr.f32.mxu0 0.0
  %121 = vmatmul.mubr.f32.gmra.mxu0 %v41
  %v122 = vpop.f32.mrf.mxu0
  %v123 = vadd.f32 %v31, %v122
  %v124 = vpop.f32.mrf.mxu0
  %125 = vmatprep.mubr.f32.mxu0 0.0
  %126 = vmatmul.mubr.f32.gmra.mxu0 %v44
  %v127 = vpop.f32.mrf.mxu0
  %v128 = vadd.f32 %v31, %v127
  %v129 = vpop.f32.mrf.mxu0
  %130 = vdwg.mxu0
  %vm131 = vcmask 64512
  %132 = vst.msk [vmem:[%s3] sm:$0xff] %vm131, %v113
  %133 = vst.msk [vmem:[%s3 + $0x8] sm:$0xff] %vm131, %v118
  %134 = vst.msk [vmem:[%s3 + $0x10] sm:$0xff] %vm131, %v123
  %135 = vst.msk [vmem:[%s3 + $0x18] sm:$0xff] %vm131, %v128
  // Predicated region
  $region14: #{dna_block_forward.15} parent=0 // pred_check
    _
  $region15: #{dna_block_forward.15} parent=0 // pred_check_branch
    %137 = sbr.rel (0) target = $region17
  $region16: #{dna_block_forward.15} parent=0 // pred_region
    _
  $region17: #{dna_block_forward.15} parent=0 // pred_fallthru
    _
  // Predicated region
  $region18: #{dna_block_forward.15} parent=0 // pred_check
    _
  $region19: #{dna_block_forward.15} parent=0 // pred_check_branch
    %139 = sbr.rel (0) target = $region21
  $region20: #{dna_block_forward.15} parent=0 // pred_region
    _
  $region21: #{dna_block_forward.15} parent=0 // pred_fallthru
    _

// kernel: dna_block_forward.18
$region0: #{dna_block_forward.18}
  #allocation0 [shape = 'u32[]', space=smem, size = 0x4, offset = 0x4, fixed_abs, tag = 'smem constant byte address 0x4 - core index']
  #allocation1 [shape = 'u32[144,128]{1,0:T(1,128)}', space=vmem, size = 0x12000, scoped, tag = 'internal scratch']
  %s0 = inlined_call_operand.vmem [shape: f32[64,8], index: 0, kind: input, shape index: {}]
  %s1 = inlined_call_operand.vmem [shape: f32[8,32], index: 1, kind: input, shape index: {}]
  %s2 = inlined_call_operand.vmem [shape: f32[1,32], index: 2, kind: input, shape index: {}]
  %s3 = inlined_call_operand.vmem [shape: f32[64,32], index: 3, kind: output, shape index: {}]
  %s4 = sld [smem:[#allocation0]]
  $region22: #{dna_block_forward.18} parent=0
    _
  %s6 = ssub.s32 1, %s4
  %s7 = scalar_select 0, %s6, %s4
  // Predicated region
  $region2: #{dna_block_forward.18} parent=0 // pred_check
    _
  $region3: #{dna_block_forward.18} parent=0 // pred_check_branch
    %9 = sbr.rel (0) target = $region5
  $region4: #{dna_block_forward.18} parent=0 // pred_region
    _
  $region5: #{dna_block_forward.18} parent=0 // pred_fallthru
    _
  // Predicated region
  $region6: #{dna_block_forward.18} parent=0 // pred_check
    _
  $region7: #{dna_block_forward.18} parent=0 // pred_check_branch
    %11 = sbr.rel (0) target = $region9
  $region8: #{dna_block_forward.18} parent=0 // pred_region
    _
  $region9: #{dna_block_forward.18} parent=0 // pred_fallthru
    _
  // Predicated region
  $region10: #{dna_block_forward.18} parent=0 // pred_check
    _
  $region11: #{dna_block_forward.18} parent=0 // pred_check_branch
    %13 = sbr.rel (0) target = $region13
  $region12: #{dna_block_forward.18} parent=0 // pred_region
    _
  $region13: #{dna_block_forward.18} parent=0 // pred_fallthru
    _
  %v14 = vld [vmem:[%s0] sm:$0xff]
  %v15 = vld [vmem:[%s0 + $0x8] sm:$0xff]
  %v16 = vld [vmem:[%s0 + $0x10] sm:$0xff]
  %v17 = vld [vmem:[%s0 + $0x18] sm:$0xff]
  %v18 = vld [vmem:[%s0 + $0x20] sm:$0xff]
  %v19 = vld [vmem:[%s0 + $0x28] sm:$0xff]
  %v20 = vld [vmem:[%s0 + $0x30] sm:$0xff]
  %v21 = vld [vmem:[%s0 + $0x38] sm:$0xff]
  %v22 = vld [vmem:[%s1] sm:$0xff]
  %v23 = vld [vmem:[%s2] sm:$0x1]
  %v25 = vlaneseq
  %v26 = vshrl.u32 %v25, 7
  %v27 = vsub.s32 0, %v26
  %v28 = vrot.slane %v23, %v27
  %vm30 = vcmask 64512
  %v32 = vsel %vm30, %v14, 0
  %v35 = vsel %vm30, %v15, 0
  %v38 = vsel %vm30, %v16, 0
  %v41 = vsel %vm30, %v17, 0
  %v44 = vsel %vm30, %v18, 0
  %v47 = vsel %vm30, %v19, 0
  %v50 = vsel %vm30, %v20, 0
  %v53 = vsel %vm30, %v21, 0
  %55 = vmatprep.subr.mxu0 0.0
  %56 = vmatpush1.msra.mxu0 0.0
  %57 = vmatprep.subr.mxu0 0.0
  %58 = vmatpush1.msra.mxu0 0.0
  %59 = vmatprep.subr.mxu0 0.0
  %60 = vmatpush1.msra.mxu0 0.0
  %61 = vmatprep.subr.mxu0 0.0
  %62 = vmatpush1.msra.mxu0 0.0
  %63 = vmatprep.subr.mxu0 0.0
  %64 = vmatpush1.msra.mxu0 0.0
  %65 = vmatprep.subr.mxu0 0.0
  %66 = vmatpush1.msra.mxu0 0.0
  %67 = vmatprep.subr.mxu0 0.0
  %68 = vmatpush1.msra.mxu0 0.0
  %69 = vmatprep.subr.mxu0 0.0
  %70 = vmatpush1.msra.mxu0 0.0
  %71 = vmatprep.subr.mxu0 0.0
  %72 = vmatpush1.msra.mxu0 0.0
  %73 = vmatprep.subr.mxu0 0.0
  %74 = vmatpush1.msra.mxu0 0.0
  %75 = vmatprep.subr.mxu0 0.0
  %76 = vmatpush1.msra.mxu0 0.0
  %77 = vmatprep.subr.mxu0 0.0
  %78 = vmatpush1.msra.mxu0 0.0
  %79 = vmatprep.subr.mxu0 0.0
  %80 = vmatpush1.msra.mxu0 0.0
  %81 = vmatprep.subr.mxu0 0.0
  %82 = vmatpush1.msra.mxu0 0.0
  %83 = vmatprep.subr.mxu0 0.0
  %84 = vmatpush1.msra.mxu0 0.0
  %85 = vmatprep.subr.mxu0 0.0
  %86 = vmatpush1.msra.mxu0 %v22
  %87 = vmatprep.subr.mxu0 0.0
  %88 = vmatpush2.msra.mxu0 0.0
  %89 = vmatprep.subr.mxu0 0.0
  %90 = vmatpush2.msra.mxu0 0.0
  %91 = vmatprep.subr.mxu0 0.0
  %92 = vmatpush2.msra.mxu0 0.0
  %93 = vmatprep.subr.mxu0 0.0
  %94 = vmatpush2.msra.mxu0 0.0
  %95 = vmatprep.subr.mxu0 0.0
  %96 = vmatpush2.msra.mxu0 0.0
  %97 = vmatprep.subr.mxu0 0.0
  %98 = vmatpush2.msra.mxu0 0.0
  %99 = vmatprep.subr.mxu0 0.0
  %100 = vmatpush2.msra.mxu0 0.0
  %101 = vmatprep.subr.mxu0 0.0
  %102 = vmatpush2.msra.mxu0 0.0
  %103 = vmatprep.subr.mxu0 0.0
  %104 = vmatpush2.msra.mxu0 0.0
  %105 = vmatprep.subr.mxu0 0.0
  %106 = vmatpush2.msra.mxu0 0.0
  %107 = vmatprep.subr.mxu0 0.0
  %108 = vmatpush2.msra.mxu0 0.0
  %109 = vmatprep.subr.mxu0 0.0
  %110 = vmatpush2.msra.mxu0 0.0
  %111 = vmatprep.subr.mxu0 0.0
  %112 = vmatpush2.msra.mxu0 0.0
  %113 = vmatprep.subr.mxu0 0.0
  %114 = vmatpush2.msra.mxu0 0.0
  %115 = vmatprep.subr.mxu0 0.0
  %116 = vmatpush2.msra.mxu0 0.0
  %117 = vmatprep.subr.mxu0 0.0
  %118 = vmatpush2.msra.mxu0 0.0
  %119 = vmatprep.mubr.f32.mxu0 0.0
  %120 = vmatmul.mubr.f32.gmra.mxu0 %v32
  %v121 = vpop.f32.mrf.mxu0
  %v122 = vadd.f32 %v28, %v121
  %v123 = vpop.f32.mrf.mxu0
  %124 = vmatprep.mubr.f32.mxu0 0.0
  %125 = vmatmul.mubr.f32.gmra.mxu0 %v35
  %v126 = vpop.f32.mrf.mxu0
  %v127 = vadd.f32 %v28, %v126
  %v128 = vpop.f32.mrf.mxu0
  %129 = vmatprep.mubr.f32.mxu0 0.0
  %130 = vmatmul.mubr.f32.gmra.mxu0 %v38
  %v131 = vpop.f32.mrf.mxu0
  %v132 = vadd.f32 %v28, %v131
  %v133 = vpop.f32.mrf.mxu0
  %134 = vmatprep.mubr.f32.mxu0 0.0
  %135 = vmatmul.mubr.f32.gmra.mxu0 %v41
  %v136 = vpop.f32.mrf.mxu0
  %v137 = vadd.f32 %v28, %v136
  %v138 = vpop.f32.mrf.mxu0
  %139 = vmatprep.mubr.f32.mxu0 0.0
  %140 = vmatmul.mubr.f32.gmra.mxu0 %v44
  %v141 = vpop.f32.mrf.mxu0
  %v142 = vadd.f32 %v28, %v141
  %v143 = vpop.f32.mrf.mxu0
  %144 = vmatprep.mubr.f32.mxu0 0.0
  %145 = vmatmul.mubr.f32.gmra.mxu0 %v47
  %v146 = vpop.f32.mrf.mxu0
  %v147 = vadd.f32 %v28, %v146
  %v148 = vpop.f32.mrf.mxu0
  %149 = vmatprep.mubr.f32.mxu0 0.0
  %150 = vmatmul.mubr.f32.gmra.mxu0 %v50
  %v151 = vpop.f32.mrf.mxu0
  %v152 = vadd.f32 %v28, %v151
  %v153 = vpop.f32.mrf.mxu0
  %154 = vmatprep.mubr.f32.mxu0 0.0
  %155 = vmatmul.mubr.f32.gmra.mxu0 %v53
  %v156 = vpop.f32.mrf.mxu0
  %v157 = vadd.f32 %v28, %v156
  %v158 = vpop.f32.mrf.mxu0
  %159 = vdwg.mxu0
  %v160 = vmul.f32 %v122, %v122
  %v161 = vmul.f32 %v127, %v127
  %v162 = vmul.f32 %v132, %v132
  %v163 = vmul.f32 %v137, %v137
  %v164 = vmul.f32 %v142, %v142
  %v165 = vmul.f32 %v147, %v147
  %v166 = vmul.f32 %v152, %v152
  %v167 = vmul.f32 %v157, %v157
  %v168 = vmul.f32 %v122, %v160
  %v169 = vmul.f32 %v127, %v161
  %v170 = vmul.f32 %v132, %v162
  %v171 = vmul.f32 %v137, %v163
  %v172 = vmul.f32 %v142, %v164
  %v173 = vmul.f32 %v147, %v165
  %v174 = vmul.f32 %v152, %v166
  %v175 = vmul.f32 %v157, %v167
  %v176 = vmul.f32 %v168, 0.044715
  %v177 = vmul.f32 %v169, 0.044715
  %v178 = vmul.f32 %v170, 0.044715
  %v179 = vmul.f32 %v171, 0.044715
  %v180 = vmul.f32 %v172, 0.044715
  %v181 = vmul.f32 %v173, 0.044715
  %v182 = vmul.f32 %v174, 0.044715
  %v183 = vmul.f32 %v175, 0.044715
  %v184 = vadd.f32 %v122, %v176
  %v185 = vadd.f32 %v127, %v177
  %v186 = vadd.f32 %v132, %v178
  %v187 = vadd.f32 %v137, %v179
  %v188 = vadd.f32 %v142, %v180
  %v189 = vadd.f32 %v147, %v181
  %v190 = vadd.f32 %v152, %v182
  %v191 = vadd.f32 %v157, %v183
  %v192 = vmul.f32 %v184, 0.7978846
  %v193 = vmul.f32 %v185, 0.7978846
  %v194 = vmul.f32 %v186, 0.7978846
  %v195 = vmul.f32 %v187, 0.7978846
  %v196 = vmul.f32 %v188, 0.7978846
  %v197 = vmul.f32 %v189, 0.7978846
  %v198 = vmul.f32 %v190, 0.7978846
  %v199 = vmul.f32 %v191, 0.7978846
  %v200 = vtanh.pop %v192
  %v201 = vtanh.pop %v193
  %v202 = vtanh.pop %v194
  %v203 = vtanh.pop %v195
  %v204 = vtanh.pop %v196
  %v205 = vtanh.pop %v197
  %v206 = vtanh.pop %v198
  %v207 = vtanh.pop %v199
  %v208 = vadd.f32 %v200, 1.0
  %v209 = vadd.f32 %v201, 1.0
  %v210 = vadd.f32 %v202, 1.0
  %v211 = vadd.f32 %v203, 1.0
  %v212 = vadd.f32 %v204, 1.0
  %v213 = vadd.f32 %v205, 1.0
  %v214 = vadd.f32 %v206, 1.0
  %v215 = vadd.f32 %v207, 1.0
  %v216 = vmul.f32 %v208, 0.5
  %v217 = vmul.f32 %v209, 0.5
  %v218 = vmul.f32 %v210, 0.5
  %v219 = vmul.f32 %v211, 0.5
  %v220 = vmul.f32 %v212, 0.5
  %v221 = vmul.f32 %v213, 0.5
  %v222 = vmul.f32 %v214, 0.5
  %v223 = vmul.f32 %v215, 0.5
  %v224 = vmul.f32 %v122, %v216
  %v225 = vmul.f32 %v127, %v217
  %v226 = vmul.f32 %v132, %v218
  %v227 = vmul.f32 %v137, %v219
  %v228 = vmul.f32 %v142, %v220
  %v229 = vmul.f32 %v147, %v221
  %v230 = vmul.f32 %v152, %v222
  %v231 = vmul.f32 %v157, %v223
  %vm232 = vcmask 261120
  %233 = vst.msk [vmem:[%s3] sm:$0xff] %vm232, %v224
  %234 = vst.msk [vmem:[%s3 + $0x8] sm:$0xff] %vm232, %v225
  %235 = vst.msk [vmem:[%s3 + $0x10] sm:$0xff] %vm232, %v226
  %236 = vst.msk [vmem:[%s3 + $0x18] sm:$0xff] %vm232, %v227
  %237 = vst.msk [vmem:[%s3 + $0x20] sm:$0xff] %vm232, %v228
  %238 = vst.msk [vmem:[%s3 + $0x28] sm:$0xff] %vm232, %v229
  %239 = vst.msk [vmem:[%s3 + $0x30] sm:$0xff] %vm232, %v230
  %240 = vst.msk [vmem:[%s3 + $0x38] sm:$0xff] %vm232, %v231
  // Predicated region
  $region14: #{dna_block_forward.18} parent=0 // pred_check
    _
  $region15: #{dna_block_forward.18} parent=0 // pred_check_branch
    %242 = sbr.rel (0) target = $region17
  $region16: #{dna_block_forward.18} parent=0 // pred_region
    _
  $region17: #{dna_block_forward.18} parent=0 // pred_fallthru
    _
  // Predicated region
  $region18: #{dna_block_forward.18} parent=0 // pred_check
    _
  $region19: #{dna_block_forward.18} parent=0 // pred_check_branch
    %244 = sbr.rel (0) target = $region21
  $region20: #{dna_block_forward.18} parent=0 // pred_region
    _
  $region21: #{dna_block_forward.18} parent=0 // pred_fallthru
    _

// kernel: dna_block_forward.20
$region0: #{dna_block_forward.20}
  #allocation0 [shape = 'u32[]', space=smem, size = 0x4, offset = 0x4, fixed_abs, tag = 'smem constant byte address 0x4 - core index']
  #allocation1 [shape = 'u32[144,128]{1,0:T(1,128)}', space=vmem, size = 0x12000, scoped, tag = 'internal scratch']
  %s0 = inlined_call_operand.vmem [shape: f32[16,32], index: 0, kind: input, shape index: {}]
  %s1 = inlined_call_operand.vmem [shape: f32[32,32], index: 1, kind: input, shape index: {}]
  %s2 = inlined_call_operand.vmem [shape: f32[1,32], index: 2, kind: input, shape index: {}]
  %s3 = inlined_call_operand.vmem [shape: f32[16,32], index: 3, kind: output, shape index: {}]
  %s4 = sld [smem:[#allocation0]]
  $region22: #{dna_block_forward.20} parent=0
    _
  %s6 = ssub.s32 1, %s4
  %s7 = scalar_select 0, %s6, %s4
  // Predicated region
  $region2: #{dna_block_forward.20} parent=0 // pred_check
    _
  $region3: #{dna_block_forward.20} parent=0 // pred_check_branch
    %9 = sbr.rel (0) target = $region5
  $region4: #{dna_block_forward.20} parent=0 // pred_region
    _
  $region5: #{dna_block_forward.20} parent=0 // pred_fallthru
    _
  // Predicated region
  $region6: #{dna_block_forward.20} parent=0 // pred_check
    _
  $region7: #{dna_block_forward.20} parent=0 // pred_check_branch
    %11 = sbr.rel (0) target = $region9
  $region8: #{dna_block_forward.20} parent=0 // pred_region
    _
  $region9: #{dna_block_forward.20} parent=0 // pred_fallthru
    _
  // Predicated region
  $region10: #{dna_block_forward.20} parent=0 // pred_check
    _
  $region11: #{dna_block_forward.20} parent=0 // pred_check_branch
    %13 = sbr.rel (0) target = $region13
  $region12: #{dna_block_forward.20} parent=0 // pred_region
    _
  $region13: #{dna_block_forward.20} parent=0 // pred_fallthru
    _
  %v14 = vld [vmem:[%s0] sm:$0xff]
  %v15 = vld [vmem:[%s0 + $0x8] sm:$0xff]
  %v16 = vld [vmem:[%s1] sm:$0xff]
  %v17 = vld [vmem:[%s1 + $0x8] sm:$0xff]
  %v18 = vld [vmem:[%s1 + $0x10] sm:$0xff]
  %v19 = vld [vmem:[%s1 + $0x18] sm:$0xff]
  %v20 = vld [vmem:[%s2] sm:$0x1]
  %v22 = vlaneseq
  %v23 = vshrl.u32 %v22, 7
  %v24 = vsub.s32 0, %v23
  %v25 = vrot.slane %v20, %v24
  %vm27 = vcmask 261120
  %v29 = vsel %vm27, %v14, 0
  %v32 = vsel %vm27, %v15, 0
  %34 = vmatprep.subr.mxu0 0.0
  %35 = vmatpush1.msra.mxu0 0.0
  %36 = vmatprep.subr.mxu0 0.0
  %37 = vmatpush1.msra.mxu0 0.0
  %38 = vmatprep.subr.mxu0 0.0
  %39 = vmatpush1.msra.mxu0 0.0
  %40 = vmatprep.subr.mxu0 0.0
  %41 = vmatpush1.msra.mxu0 0.0
  %42 = vmatprep.subr.mxu0 0.0
  %43 = vmatpush1.msra.mxu0 0.0
  %44 = vmatprep.subr.mxu0 0.0
  %45 = vmatpush1.msra.mxu0 0.0
  %46 = vmatprep.subr.mxu0 0.0
  %47 = vmatpush1.msra.mxu0 0.0
  %48 = vmatprep.subr.mxu0 0.0
  %49 = vmatpush1.msra.mxu0 0.0
  %50 = vmatprep.subr.mxu0 0.0
  %51 = vmatpush1.msra.mxu0 0.0
  %52 = vmatprep.subr.mxu0 0.0
  %53 = vmatpush1.msra.mxu0 0.0
  %54 = vmatprep.subr.mxu0 0.0
  %55 = vmatpush1.msra.mxu0 0.0
  %56 = vmatprep.subr.mxu0 0.0
  %57 = vmatpush1.msra.mxu0 0.0
  %58 = vmatprep.subr.mxu0 0.0
  %59 = vmatpush1.msra.mxu0 %v19
  %60 = vmatprep.subr.mxu0 0.0
  %61 = vmatpush1.msra.mxu0 %v18
  %62 = vmatprep.subr.mxu0 0.0
  %63 = vmatpush1.msra.mxu0 %v17
  %64 = vmatprep.subr.mxu0 0.0
  %65 = vmatpush1.msra.mxu0 %v16
  %66 = vmatprep.subr.mxu0 0.0
  %67 = vmatpush2.msra.mxu0 0.0
  %68 = vmatprep.subr.mxu0 0.0
  %69 = vmatpush2.msra.mxu0 0.0
  %70 = vmatprep.subr.mxu0 0.0
  %71 = vmatpush2.msra.mxu0 0.0
  %72 = vmatprep.subr.mxu0 0.0
  %73 = vmatpush2.msra.mxu0 0.0
  %74 = vmatprep.subr.mxu0 0.0
  %75 = vmatpush2.msra.mxu0 0.0
  %76 = vmatprep.subr.mxu0 0.0
  %77 = vmatpush2.msra.mxu0 0.0
  %78 = vmatprep.subr.mxu0 0.0
  %79 = vmatpush2.msra.mxu0 0.0
  %80 = vmatprep.subr.mxu0 0.0
  %81 = vmatpush2.msra.mxu0 0.0
  %82 = vmatprep.subr.mxu0 0.0
  %83 = vmatpush2.msra.mxu0 0.0
  %84 = vmatprep.subr.mxu0 0.0
  %85 = vmatpush2.msra.mxu0 0.0
  %86 = vmatprep.subr.mxu0 0.0
  %87 = vmatpush2.msra.mxu0 0.0
  %88 = vmatprep.subr.mxu0 0.0
  %89 = vmatpush2.msra.mxu0 0.0
  %90 = vmatprep.subr.mxu0 0.0
  %91 = vmatpush2.msra.mxu0 0.0
  %92 = vmatprep.subr.mxu0 0.0
  %93 = vmatpush2.msra.mxu0 0.0
  %94 = vmatprep.subr.mxu0 0.0
  %95 = vmatpush2.msra.mxu0 0.0
  %96 = vmatprep.subr.mxu0 0.0
  %97 = vmatpush2.msra.mxu0 0.0
  %98 = vmatprep.mubr.f32.mxu0 0.0
  %99 = vmatmul.mubr.f32.gmra.mxu0 %v29
  %v100 = vpop.f32.mrf.mxu0
  %v101 = vadd.f32 %v25, %v100
  %v102 = vpop.f32.mrf.mxu0
  %103 = vmatprep.mubr.f32.mxu0 0.0
  %104 = vmatmul.mubr.f32.gmra.mxu0 %v32
  %v105 = vpop.f32.mrf.mxu0
  %v106 = vadd.f32 %v25, %v105
  %v107 = vpop.f32.mrf.mxu0
  %108 = vdwg.mxu0
  %109 = vst.msk [vmem:[%s3] sm:$0xff] %vm27, %v101
  %110 = vst.msk [vmem:[%s3 + $0x8] sm:$0xff] %vm27, %v106
  // Predicated region
  $region14: #{dna_block_forward.20} parent=0 // pred_check
    _
  $region15: #{dna_block_forward.20} parent=0 // pred_check_branch
    %112 = sbr.rel (0) target = $region17
  $region16: #{dna_block_forward.20} parent=0 // pred_region
    _
  $region17: #{dna_block_forward.20} parent=0 // pred_fallthru
    _
  // Predicated region
  $region18: #{dna_block_forward.20} parent=0 // pred_check
    _
  $region19: #{dna_block_forward.20} parent=0 // pred_check_branch
    %114 = sbr.rel (0) target = $region21
  $region20: #{dna_block_forward.20} parent=0 // pred_region
    _
  $region21: #{dna_block_forward.20} parent=0 // pred_fallthru
    _

// kernel: dna_block_forward.25
$region0: #{dna_block_forward.25}
  #allocation0 [shape = 'u32[]', space=smem, size = 0x4, offset = 0x4, fixed_abs, tag = 'smem constant byte address 0x4 - core index']
  #allocation1 [shape = 'u32[144,128]{1,0:T(1,128)}', space=vmem, size = 0x12000, scoped, tag = 'internal scratch']
  %s0 = inlined_call_operand.vmem [shape: f32[8,32], index: 0, kind: input, shape index: {}]
  %s1 = inlined_call_operand.vmem [shape: f32[32,8], index: 1, kind: input, shape index: {}]
  %s2 = inlined_call_operand.vmem [shape: f32[1,8], index: 2, kind: input, shape index: {}]
  %s3 = inlined_call_operand.vmem [shape: f32[8,8], index: 3, kind: output, shape index: {}]
  %s4 = sld [smem:[#allocation0]]
  $region22: #{dna_block_forward.25} parent=0
    _
  %s6 = ssub.s32 1, %s4
  %s7 = scalar_select 0, %s6, %s4
  // Predicated region
  $region2: #{dna_block_forward.25} parent=0 // pred_check
    _
  $region3: #{dna_block_forward.25} parent=0 // pred_check_branch
    %9 = sbr.rel (0) target = $region5
  $region4: #{dna_block_forward.25} parent=0 // pred_region
    _
  $region5: #{dna_block_forward.25} parent=0 // pred_fallthru
    _
  // Predicated region
  $region6: #{dna_block_forward.25} parent=0 // pred_check
    _
  $region7: #{dna_block_forward.25} parent=0 // pred_check_branch
    %11 = sbr.rel (0) target = $region9
  $region8: #{dna_block_forward.25} parent=0 // pred_region
    _
  $region9: #{dna_block_forward.25} parent=0 // pred_fallthru
    _
  // Predicated region
  $region10: #{dna_block_forward.25} parent=0 // pred_check
    _
  $region11: #{dna_block_forward.25} parent=0 // pred_check_branch
    %13 = sbr.rel (0) target = $region13
  $region12: #{dna_block_forward.25} parent=0 // pred_region
    _
  $region13: #{dna_block_forward.25} parent=0 // pred_fallthru
    _
  %v14 = vld [vmem:[%s0] sm:$0xff]
  %v15 = vld [vmem:[%s1] sm:$0xff]
  %v16 = vld [vmem:[%s1 + $0x8] sm:$0xff]
  %v17 = vld [vmem:[%s1 + $0x10] sm:$0xff]
  %v18 = vld [vmem:[%s1 + $0x18] sm:$0xff]
  %v19 = vld [vmem:[%s2] sm:$0x1]
  %v21 = vlaneseq
  %v22 = vshrl.u32 %v21, 7
  %v23 = vsub.s32 0, %v22
  %v24 = vrot.slane %v19, %v23
  %vm26 = vcmask 261120
  %v28 = vsel %vm26, %v14, 0
  %30 = vmatprep.subr.mxu0 0.0
  %31 = vmatpush1.msra.mxu0 0.0
  %32 = vmatprep.subr.mxu0 0.0
  %33 = vmatpush1.msra.mxu0 0.0
  %34 = vmatprep.subr.mxu0 0.0
  %35 = vmatpush1.msra.mxu0 0.0
  %36 = vmatprep.subr.mxu0 0.0
  %37 = vmatpush1.msra.mxu0 0.0
  %38 = vmatprep.subr.mxu0 0.0
  %39 = vmatpush1.msra.mxu0 0.0
  %40 = vmatprep.subr.mxu0 0.0
  %41 = vmatpush1.msra.mxu0 0.0
  %42 = vmatprep.subr.mxu0 0.0
  %43 = vmatpush1.msra.mxu0 0.0
  %44 = vmatprep.subr.mxu0 0.0
  %45 = vmatpush1.msra.mxu0 0.0
  %46 = vmatprep.subr.mxu0 0.0
  %47 = vmatpush1.msra.mxu0 0.0
  %48 = vmatprep.subr.mxu0 0.0
  %49 = vmatpush1.msra.mxu0 0.0
  %50 = vmatprep.subr.mxu0 0.0
  %51 = vmatpush1.msra.mxu0 0.0
  %52 = vmatprep.subr.mxu0 0.0
  %53 = vmatpush1.msra.mxu0 0.0
  %54 = vmatprep.subr.mxu0 0.0
  %55 = vmatpush1.msra.mxu0 %v18
  %56 = vmatprep.subr.mxu0 0.0
  %57 = vmatpush1.msra.mxu0 %v17
  %58 = vmatprep.subr.mxu0 0.0
  %59 = vmatpush1.msra.mxu0 %v16
  %60 = vmatprep.subr.mxu0 0.0
  %61 = vmatpush1.msra.mxu0 %v15
  %62 = vmatprep.subr.mxu0 0.0
  %63 = vmatpush2.msra.mxu0 0.0
  %64 = vmatprep.subr.mxu0 0.0
  %65 = vmatpush2.msra.mxu0 0.0
  %66 = vmatprep.subr.mxu0 0.0
  %67 = vmatpush2.msra.mxu0 0.0
  %68 = vmatprep.subr.mxu0 0.0
  %69 = vmatpush2.msra.mxu0 0.0
  %70 = vmatprep.subr.mxu0 0.0
  %71 = vmatpush2.msra.mxu0 0.0
  %72 = vmatprep.subr.mxu0 0.0
  %73 = vmatpush2.msra.mxu0 0.0
  %74 = vmatprep.subr.mxu0 0.0
  %75 = vmatpush2.msra.mxu0 0.0
  %76 = vmatprep.subr.mxu0 0.0
  %77 = vmatpush2.msra.mxu0 0.0
  %78 = vmatprep.subr.mxu0 0.0
  %79 = vmatpush2.msra.mxu0 0.0
  %80 = vmatprep.subr.mxu0 0.0
  %81 = vmatpush2.msra.mxu0 0.0
  %82 = vmatprep.subr.mxu0 0.0
  %83 = vmatpush2.msra.mxu0 0.0
  %84 = vmatprep.subr.mxu0 0.0
  %85 = vmatpush2.msra.mxu0 0.0
  %86 = vmatprep.subr.mxu0 0.0
  %87 = vmatpush2.msra.mxu0 0.0
  %88 = vmatprep.subr.mxu0 0.0
  %89 = vmatpush2.msra.mxu0 0.0
  %90 = vmatprep.subr.mxu0 0.0
  %91 = vmatpush2.msra.mxu0 0.0
  %92 = vmatprep.subr.mxu0 0.0
  %93 = vmatpush2.msra.mxu0 0.0
  %94 = vmatprep.mubr.f32.mxu0 0.0
  %95 = vmatmul.mubr.f32.gmra.mxu0 %v28
  %v96 = vpop.f32.mrf.mxu0
  %v97 = vadd.f32 %v24, %v96
  %v98 = vpop.f32.mrf.mxu0
  %99 = vdwg.mxu0
  %v100 = vmax.f32 %v97, 0.0
  %vm101 = vcmask 64512
  %102 = vst.msk [vmem:[%s3] sm:$0xff] %vm101, %v100
  // Predicated region
  $region14: #{dna_block_forward.25} parent=0 // pred_check
    _
  $region15: #{dna_block_forward.25} parent=0 // pred_check_branch
    %104 = sbr.rel (0) target = $region17
  $region16: #{dna_block_forward.25} parent=0 // pred_region
    _
  $region17: #{dna_block_forward.25} parent=0 // pred_fallthru
    _
  // Predicated region
  $region18: #{dna_block_forward.25} parent=0 // pred_check
    _
  $region19: #{dna_block_forward.25} parent=0 // pred_check_branch
    %106 = sbr.rel (0) target = $region21
  $region20: #{dna_block_forward.25} parent=0 // pred_region
    _
  $region21: #{dna_block_forward.25} parent=0 // pred_fallthru
    _

// kernel: dna_block_forward.19
$region0: #{dna_block_forward.19}
  #allocation0 [shape = 'u32[]', space=smem, size = 0x4, offset = 0x4, fixed_abs, tag = 'smem constant byte address 0x4 - core index']
  #allocation1 [shape = 'u32[144,128]{1,0:T(1,128)}', space=vmem, size = 0x12000, scoped, tag = 'internal scratch']
  %s0 = inlined_call_operand.vmem [shape: f32[64,32], index: 0, kind: input, shape index: {}]
  %s1 = inlined_call_operand.vmem [shape: f32[32,8], index: 1, kind: input, shape index: {}]
  %s2 = inlined_call_operand.vmem [shape: f32[1,8], index: 2, kind: input, shape index: {}]
  %s3 = inlined_call_operand.vmem [shape: f32[64,8], index: 3, kind: output, shape index: {}]
  %s4 = sld [smem:[#allocation0]]
  $region22: #{dna_block_forward.19} parent=0
    _
  %s6 = ssub.s32 1, %s4
  %s7 = scalar_select 0, %s6, %s4
  // Predicated region
  $region2: #{dna_block_forward.19} parent=0 // pred_check
    _
  $region3: #{dna_block_forward.19} parent=0 // pred_check_branch
    %9 = sbr.rel (0) target = $region5
  $region4: #{dna_block_forward.19} parent=0 // pred_region
    _
  $region5: #{dna_block_forward.19} parent=0 // pred_fallthru
    _
  // Predicated region
  $region6: #{dna_block_forward.19} parent=0 // pred_check
    _
  $region7: #{dna_block_forward.19} parent=0 // pred_check_branch
    %11 = sbr.rel (0) target = $region9
  $region8: #{dna_block_forward.19} parent=0 // pred_region
    _
  $region9: #{dna_block_forward.19} parent=0 // pred_fallthru
    _
  // Predicated region
  $region10: #{dna_block_forward.19} parent=0 // pred_check
    _
  $region11: #{dna_block_forward.19} parent=0 // pred_check_branch
    %13 = sbr.rel (0) target = $region13
  $region12: #{dna_block_forward.19} parent=0 // pred_region
    _
  $region13: #{dna_block_forward.19} parent=0 // pred_fallthru
    _
  %v14 = vld [vmem:[%s0] sm:$0xff]
  %v15 = vld [vmem:[%s0 + $0x8] sm:$0xff]
  %v16 = vld [vmem:[%s0 + $0x10] sm:$0xff]
  %v17 = vld [vmem:[%s0 + $0x18] sm:$0xff]
  %v18 = vld [vmem:[%s0 + $0x20] sm:$0xff]
  %v19 = vld [vmem:[%s0 + $0x28] sm:$0xff]
  %v20 = vld [vmem:[%s0 + $0x30] sm:$0xff]
  %v21 = vld [vmem:[%s0 + $0x38] sm:$0xff]
  %v22 = vld [vmem:[%s1] sm:$0xff]
  %v23 = vld [vmem:[%s1 + $0x8] sm:$0xff]
  %v24 = vld [vmem:[%s1 + $0x10] sm:$0xff]
  %v25 = vld [vmem:[%s1 + $0x18] sm:$0xff]
  %v26 = vld [vmem:[%s2] sm:$0x1]
  %v28 = vlaneseq
  %v29 = vshrl.u32 %v28, 7
  %v30 = vsub.s32 0, %v29
  %v31 = vrot.slane %v26, %v30
  %vm33 = vcmask 261120
  %v35 = vsel %vm33, %v14, 0
  %v38 = vsel %vm33, %v15, 0
  %v41 = vsel %vm33, %v16, 0
  %v44 = vsel %vm33, %v17, 0
  %v47 = vsel %vm33, %v18, 0
  %v50 = vsel %vm33, %v19, 0
  %v53 = vsel %vm33, %v20, 0
  %v56 = vsel %vm33, %v21, 0
  %58 = vmatprep.subr.mxu0 0.0
  %59 = vmatpush1.msra.mxu0 0.0
  %60 = vmatprep.subr.mxu0 0.0
  %61 = vmatpush1.msra.mxu0 0.0
  %62 = vmatprep.subr.mxu0 0.0
  %63 = vmatpush1.msra.mxu0 0.0
  %64 = vmatprep.subr.mxu0 0.0
  %65 = vmatpush1.msra.mxu0 0.0
  %66 = vmatprep.subr.mxu0 0.0
  %67 = vmatpush1.msra.mxu0 0.0
  %68 = vmatprep.subr.mxu0 0.0
  %69 = vmatpush1.msra.mxu0 0.0
  %70 = vmatprep.subr.mxu0 0.0
  %71 = vmatpush1.msra.mxu0 0.0
  %72 = vmatprep.subr.mxu0 0.0
  %73 = vmatpush1.msra.mxu0 0.0
  %74 = vmatprep.subr.mxu0 0.0
  %75 = vmatpush1.msra.mxu0 0.0
  %76 = vmatprep.subr.mxu0 0.0
  %77 = vmatpush1.msra.mxu0 0.0
  %78 = vmatprep.subr.mxu0 0.0
  %79 = vmatpush1.msra.mxu0 0.0
  %80 = vmatprep.subr.mxu0 0.0
  %81 = vmatpush1.msra.mxu0 0.0
  %82 = vmatprep.subr.mxu0 0.0
  %83 = vmatpush1.msra.mxu0 %v25
  %84 = vmatprep.subr.mxu0 0.0
  %85 = vmatpush1.msra.mxu0 %v24
  %86 = vmatprep.subr.mxu0 0.0
  %87 = vmatpush1.msra.mxu0 %v23
  %88 = vmatprep.subr.mxu0 0.0
  %89 = vmatpush1.msra.mxu0 %v22
  %90 = vmatprep.subr.mxu0 0.0
  %91 = vmatpush2.msra.mxu0 0.0
  %92 = vmatprep.subr.mxu0 0.0
  %93 = vmatpush2.msra.mxu0 0.0
  %94 = vmatprep.subr.mxu0 0.0
  %95 = vmatpush2.msra.mxu0 0.0
  %96 = vmatprep.subr.mxu0 0.0
  %97 = vmatpush2.msra.mxu0 0.0
  %98 = vmatprep.subr.mxu0 0.0
  %99 = vmatpush2.msra.mxu0 0.0
  %100 = vmatprep.subr.mxu0 0.0
  %101 = vmatpush2.msra.mxu0 0.0
  %102 = vmatprep.subr.mxu0 0.0
  %103 = vmatpush2.msra.mxu0 0.0
  %104 = vmatprep.subr.mxu0 0.0
  %105 = vmatpush2.msra.mxu0 0.0
  %106 = vmatprep.subr.mxu0 0.0
  %107 = vmatpush2.msra.mxu0 0.0
  %108 = vmatprep.subr.mxu0 0.0
  %109 = vmatpush2.msra.mxu0 0.0
  %110 = vmatprep.subr.mxu0 0.0
  %111 = vmatpush2.msra.mxu0 0.0
  %112 = vmatprep.subr.mxu0 0.0
  %113 = vmatpush2.msra.mxu0 0.0
  %114 = vmatprep.subr.mxu0 0.0
  %115 = vmatpush2.msra.mxu0 0.0
  %116 = vmatprep.subr.mxu0 0.0
  %117 = vmatpush2.msra.mxu0 0.0
  %118 = vmatprep.subr.mxu0 0.0
  %119 = vmatpush2.msra.mxu0 0.0
  %120 = vmatprep.subr.mxu0 0.0
  %121 = vmatpush2.msra.mxu0 0.0
  %122 = vmatprep.mubr.f32.mxu0 0.0
  %123 = vmatmul.mubr.f32.gmra.mxu0 %v35
  %v124 = vpop.f32.mrf.mxu0
  %v125 = vadd.f32 %v31, %v124
  %v126 = vpop.f32.mrf.mxu0
  %127 = vmatprep.mubr.f32.mxu0 0.0
  %128 = vmatmul.mubr.f32.gmra.mxu0 %v38
  %v129 = vpop.f32.mrf.mxu0
  %v130 = vadd.f32 %v31, %v129
  %v131 = vpop.f32.mrf.mxu0
  %132 = vmatprep.mubr.f32.mxu0 0.0
  %133 = vmatmul.mubr.f32.gmra.mxu0 %v41
  %v134 = vpop.f32.mrf.mxu0
  %v135 = vadd.f32 %v31, %v134
  %v136 = vpop.f32.mrf.mxu0
  %137 = vmatprep.mubr.f32.mxu0 0.0
  %138 = vmatmul.mubr.f32.gmra.mxu0 %v44
  %v139 = vpop.f32.mrf.mxu0
  %v140 = vadd.f32 %v31, %v139
  %v141 = vpop.f32.mrf.mxu0
  %142 = vmatprep.mubr.f32.mxu0 0.0
  %143 = vmatmul.mubr.f32.gmra.mxu0 %v47
  %v144 = vpop.f32.mrf.mxu0
  %v145 = vadd.f32 %v31, %v144
  %v146 = vpop.f32.mrf.mxu0
  %147 = vmatprep.mubr.f32.mxu0 0.0
  %148 = vmatmul.mubr.f32.gmra.mxu0 %v50
  %v149 = vpop.f32.mrf.mxu0
  %v150 = vadd.f32 %v31, %v149
  %v151 = vpop.f32.mrf.mxu0
  %152 = vmatprep.mubr.f32.mxu0 0.0
  %153 = vmatmul.mubr.f32.gmra.mxu0 %v53
  %v154 = vpop.f32.mrf.mxu0
  %v155 = vadd.f32 %v31, %v154
  %v156 = vpop.f32.mrf.mxu0
  %157 = vmatprep.mubr.f32.mxu0 0.0
  %158 = vmatmul.mubr.f32.gmra.mxu0 %v56
  %v159 = vpop.f32.mrf.mxu0
  %v160 = vadd.f32 %v31, %v159
  %v161 = vpop.f32.mrf.mxu0
  %162 = vdwg.mxu0
  %vm163 = vcmask 64512
  %164 = vst.msk [vmem:[%s3] sm:$0xff] %vm163, %v125
  %165 = vst.msk [vmem:[%s3 + $0x8] sm:$0xff] %vm163, %v130
  %166 = vst.msk [vmem:[%s3 + $0x10] sm:$0xff] %vm163, %v135
  %167 = vst.msk [vmem:[%s3 + $0x18] sm:$0xff] %vm163, %v140
  %168 = vst.msk [vmem:[%s3 + $0x20] sm:$0xff] %vm163, %v145
  %169 = vst.msk [vmem:[%s3 + $0x28] sm:$0xff] %vm163, %v150
  %170 = vst.msk [vmem:[%s3 + $0x30] sm:$0xff] %vm163, %v155
  %171 = vst.msk [vmem:[%s3 + $0x38] sm:$0xff] %vm163, %v160
  // Predicated region
  $region14: #{dna_block_forward.19} parent=0 // pred_check
    _
  $region15: #{dna_block_forward.19} parent=0 // pred_check_branch
    %173 = sbr.rel (0) target = $region17
  $region16: #{dna_block_forward.19} parent=0 // pred_region
    _
  $region17: #{dna_block_forward.19} parent=0 // pred_fallthru
    _
  // Predicated region
  $region18: #{dna_block_forward.19} parent=0 // pred_check
    _
  $region19: #{dna_block_forward.19} parent=0 // pred_check_branch
    %175 = sbr.rel (0) target = $region21
  $region20: #{dna_block_forward.19} parent=0 // pred_region
    _
  $region21: #{dna_block_forward.19} parent=0 // pred_fallthru
    _

// kernel: dna_block_forward.26
$region0: #{dna_block_forward.26}
  #allocation0 [shape = 'u32[]', space=smem, size = 0x4, offset = 0x4, fixed_abs, tag = 'smem constant byte address 0x4 - core index']
  #allocation1 [shape = 'u32[144,128]{1,0:T(1,128)}', space=vmem, size = 0x12000, scoped, tag = 'internal scratch']
  %s0 = inlined_call_operand.vmem [shape: f32[8,8], index: 0, kind: input, shape index: {}]
  %s1 = inlined_call_operand.vmem [shape: f32[8,128], index: 1, kind: input, shape index: {}]
  %s2 = inlined_call_operand.vmem [shape: f32[1,128], index: 2, kind: input, shape index: {}]
  %s3 = inlined_call_operand.vmem [shape: f32[8,128], index: 3, kind: output, shape index: {}]
  %s4 = sld [smem:[#allocation0]]
  $region22: #{dna_block_forward.26} parent=0
    _
  %s6 = ssub.s32 1, %s4
  %s7 = scalar_select 0, %s6, %s4
  // Predicated region
  $region2: #{dna_block_forward.26} parent=0 // pred_check
    _
  $region3: #{dna_block_forward.26} parent=0 // pred_check_branch
    %9 = sbr.rel (0) target = $region5
  $region4: #{dna_block_forward.26} parent=0 // pred_region
    _
  $region5: #{dna_block_forward.26} parent=0 // pred_fallthru
    _
  // Predicated region
  $region6: #{dna_block_forward.26} parent=0 // pred_check
    _
  $region7: #{dna_block_forward.26} parent=0 // pred_check_branch
    %11 = sbr.rel (0) target = $region9
  $region8: #{dna_block_forward.26} parent=0 // pred_region
    _
  $region9: #{dna_block_forward.26} parent=0 // pred_fallthru
    _
  // Predicated region
  $region10: #{dna_block_forward.26} parent=0 // pred_check
    _
  $region11: #{dna_block_forward.26} parent=0 // pred_check_branch
    %13 = sbr.rel (0) target = $region13
  $region12: #{dna_block_forward.26} parent=0 // pred_region
    _
  $region13: #{dna_block_forward.26} parent=0 // pred_fallthru
    _
  %v14 = vld [vmem:[%s0] sm:$0xff]
  %v15 = vld [vmem:[%s1] sm:$0xff]
  %v16 = vld [vmem:[%s2] sm:$0x1]
  %v18 = vlaneseq
  %v19 = vshrl.u32 %v18, 7
  %v20 = vsub.s32 0, %v19
  %v21 = vrot.slane %v16, %v20
  %vm23 = vcmask 64512
  %v25 = vsel %vm23, %v14, 0
  %27 = vmatprep.subr.mxu0 0.0
  %28 = vmatpush1.msra.mxu0 0.0
  %29 = vmatprep.subr.mxu0 0.0
  %30 = vmatpush1.msra.mxu0 0.0
  %31 = vmatprep.subr.mxu0 0.0
  %32 = vmatpush1.msra.mxu0 0.0
  %33 = vmatprep.subr.mxu0 0.0
  %34 = vmatpush1.msra.mxu0 0.0
  %35 = vmatprep.subr.mxu0 0.0
  %36 = vmatpush1.msra.mxu0 0.0
  %37 = vmatprep.subr.mxu0 0.0
  %38 = vmatpush1.msra.mxu0 0.0
  %39 = vmatprep.subr.mxu0 0.0
  %40 = vmatpush1.msra.mxu0 0.0
  %41 = vmatprep.subr.mxu0 0.0
  %42 = vmatpush1.msra.mxu0 0.0
  %43 = vmatprep.subr.mxu0 0.0
  %44 = vmatpush1.msra.mxu0 0.0
  %45 = vmatprep.subr.mxu0 0.0
  %46 = vmatpush1.msra.mxu0 0.0
  %47 = vmatprep.subr.mxu0 0.0
  %48 = vmatpush1.msra.mxu0 0.0
  %49 = vmatprep.subr.mxu0 0.0
  %50 = vmatpush1.msra.mxu0 0.0
  %51 = vmatprep.subr.mxu0 0.0
  %52 = vmatpush1.msra.mxu0 0.0
  %53 = vmatprep.subr.mxu0 0.0
  %54 = vmatpush1.msra.mxu0 0.0
  %55 = vmatprep.subr.mxu0 0.0
  %56 = vmatpush1.msra.mxu0 0.0
  %57 = vmatprep.subr.mxu0 0.0
  %58 = vmatpush1.msra.mxu0 %v15
  %59 = vmatprep.subr.mxu0 0.0
  %60 = vmatpush2.msra.mxu0 0.0
  %61 = vmatprep.subr.mxu0 0.0
  %62 = vmatpush2.msra.mxu0 0.0
  %63 = vmatprep.subr.mxu0 0.0
  %64 = vmatpush2.msra.mxu0 0.0
  %65 = vmatprep.subr.mxu0 0.0
  %66 = vmatpush2.msra.mxu0 0.0
  %67 = vmatprep.subr.mxu0 0.0
  %68 = vmatpush2.msra.mxu0 0.0
  %69 = vmatprep.subr.mxu0 0.0
  %70 = vmatpush2.msra.mxu0 0.0
  %71 = vmatprep.subr.mxu0 0.0
  %72 = vmatpush2.msra.mxu0 0.0
  %73 = vmatprep.subr.mxu0 0.0
  %74 = vmatpush2.msra.mxu0 0.0
  %75 = vmatprep.subr.mxu0 0.0
  %76 = vmatpush2.msra.mxu0 0.0
  %77 = vmatprep.subr.mxu0 0.0
  %78 = vmatpush2.msra.mxu0 0.0
  %79 = vmatprep.subr.mxu0 0.0
  %80 = vmatpush2.msra.mxu0 0.0
  %81 = vmatprep.subr.mxu0 0.0
  %82 = vmatpush2.msra.mxu0 0.0
  %83 = vmatprep.subr.mxu0 0.0
  %84 = vmatpush2.msra.mxu0 0.0
  %85 = vmatprep.subr.mxu0 0.0
  %86 = vmatpush2.msra.mxu0 0.0
  %87 = vmatprep.subr.mxu0 0.0
  %88 = vmatpush2.msra.mxu0 0.0
  %89 = vmatprep.subr.mxu0 0.0
  %90 = vmatpush2.msra.mxu0 0.0
  %91 = vmatprep.mubr.f32.mxu0 0.0
  %92 = vmatmul.mubr.f32.gmra.mxu0 %v25
  %v93 = vpop.f32.mrf.mxu0
  %v94 = vadd.f32 %v21, %v93
  %v95 = vpop.f32.mrf.mxu0
  %96 = vdwg.mxu0
  %v97 = vadd.f32 %v94, 3.0
  %v98 = vmax.f32 %v97, 0.0
  %v99 = vmin.f32 %v98, 6.0
  %v100 = vmul.f32 %v99, 0.16666667
  %101 = vst [vmem:[%s3] sm:$0xff] %v100
  // Predicated region
  $region14: #{dna_block_forward.26} parent=0 // pred_check
    _
  $region15: #{dna_block_forward.26} parent=0 // pred_check_branch
    %103 = sbr.rel (0) target = $region17
  $region16: #{dna_block_forward.26} parent=0 // pred_region
    _
  $region17: #{dna_block_forward.26} parent=0 // pred_fallthru
    _
  // Predicated region
  $region18: #{dna_block_forward.26} parent=0 // pred_check
    _
  $region19: #{dna_block_forward.26} parent=0 // pred_check_branch
    %105 = sbr.rel (0) target = $region21
  $region20: #{dna_block_forward.26} parent=0 // pred_region
    _
  $region21: #{dna_block_forward.26} parent=0 // pred_fallthru
    _

// kernel: dna_block_forward.22
$region0: #{dna_block_forward.22}
  #allocation0 [shape = 'u32[]', space=smem, size = 0x4, offset = 0x4, fixed_abs, tag = 'smem constant byte address 0x4 - core index']
  #allocation1 [shape = 'u32[144,128]{1,0:T(1,128)}', space=vmem, size = 0x12000, scoped, tag = 'internal scratch']
  %s0 = inlined_call_operand.vmem [shape: f32[128,16], index: 0, kind: input, shape index: {}]
  %s1 = inlined_call_operand.vmem [shape: f32[16,64], index: 1, kind: input, shape index: {}]
  %s2 = inlined_call_operand.vmem [shape: f32[1,64], index: 2, kind: input, shape index: {}]
  %s3 = inlined_call_operand.vmem [shape: f32[128,64], index: 3, kind: output, shape index: {}]
  %s4 = sld [smem:[#allocation0]]
  $region22: #{dna_block_forward.22} parent=0
    _
  %s6 = ssub.s32 1, %s4
  %s7 = scalar_select 0, %s6, %s4
  // Predicated region
  $region2: #{dna_block_forward.22} parent=0 // pred_check
    _
  $region3: #{dna_block_forward.22} parent=0 // pred_check_branch
    %9 = sbr.rel (0) target = $region5
  $region4: #{dna_block_forward.22} parent=0 // pred_region
    _
  $region5: #{dna_block_forward.22} parent=0 // pred_fallthru
    _
  // Predicated region
  $region6: #{dna_block_forward.22} parent=0 // pred_check
    _
  $region7: #{dna_block_forward.22} parent=0 // pred_check_branch
    %11 = sbr.rel (0) target = $region9
  $region8: #{dna_block_forward.22} parent=0 // pred_region
    _
  $region9: #{dna_block_forward.22} parent=0 // pred_fallthru
    _
  // Predicated region
  $region10: #{dna_block_forward.22} parent=0 // pred_check
    _
  $region11: #{dna_block_forward.22} parent=0 // pred_check_branch
    %13 = sbr.rel (0) target = $region13
  $region12: #{dna_block_forward.22} parent=0 // pred_region
    _
  $region13: #{dna_block_forward.22} parent=0 // pred_fallthru
    _
  %v14 = vld [vmem:[%s0] sm:$0xff]
  %v15 = vld [vmem:[%s0 + $0x8] sm:$0xff]
  %v16 = vld [vmem:[%s0 + $0x10] sm:$0xff]
  %v17 = vld [vmem:[%s0 + $0x18] sm:$0xff]
  %v18 = vld [vmem:[%s0 + $0x20] sm:$0xff]
  %v19 = vld [vmem:[%s0 + $0x28] sm:$0xff]
  %v20 = vld [vmem:[%s0 + $0x30] sm:$0xff]
  %v21 = vld [vmem:[%s0 + $0x38] sm:$0xff]
  %v22 = vld [vmem:[%s0 + $0x40] sm:$0xff]
  %v23 = vld [vmem:[%s0 + $0x48] sm:$0xff]
  %v24 = vld [vmem:[%s0 + $0x50] sm:$0xff]
  %v25 = vld [vmem:[%s0 + $0x58] sm:$0xff]
  %v26 = vld [vmem:[%s0 + $0x60] sm:$0xff]
  %v27 = vld [vmem:[%s0 + $0x68] sm:$0xff]
  %v28 = vld [vmem:[%s0 + $0x70] sm:$0xff]
  %v29 = vld [vmem:[%s0 + $0x78] sm:$0xff]
  %v30 = vld [vmem:[%s1] sm:$0xff]
  %v31 = vld [vmem:[%s1 + $0x8] sm:$0xff]
  %v32 = vld [vmem:[%s2] sm:$0x1]
  %v34 = vlaneseq
  %v35 = vshrl.u32 %v34, 7
  %v36 = vsub.s32 0, %v35
  %v37 = vrot.slane %v32, %v36
  %vm39 = vcmask 130048
  %v41 = vsel %vm39, %v14, 0
  %v44 = vsel %vm39, %v15, 0
  %v47 = vsel %vm39, %v16, 0
  %v50 = vsel %vm39, %v17, 0
  %v53 = vsel %vm39, %v18, 0
  %v56 = vsel %vm39, %v19, 0
  %v59 = vsel %vm39, %v20, 0
  %v62 = vsel %vm39, %v21, 0
  %v65 = vsel %vm39, %v22, 0
  %v68 = vsel %vm39, %v23, 0
  %v71 = vsel %vm39, %v24, 0
  %v74 = vsel %vm39, %v25, 0
  %v77 = vsel %vm39, %v26, 0
  %v80 = vsel %vm39, %v27, 0
  %v83 = vsel %vm39, %v28, 0
  %v86 = vsel %vm39, %v29, 0
  %88 = vmatprep.subr.mxu0 0.0
  %89 = vmatpush1.msra.mxu0 0.0
  %90 = vmatprep.subr.mxu0 0.0
  %91 = vmatpush1.msra.mxu0 0.0
  %92 = vmatprep.subr.mxu0 0.0
  %93 = vmatpush1.msra.mxu0 0.0
  %94 = vmatprep.subr.mxu0 0.0
  %95 = vmatpush1.msra.mxu0 0.0
  %96 = vmatprep.subr.mxu0 0.0
  %97 = vmatpush1.msra.mxu0 0.0
  %98 = vmatprep.subr.mxu0 0.0
  %99 = vmatpush1.msra.mxu0 0.0
  %100 = vmatprep.subr.mxu0 0.0
  %101 = vmatpush1.msra.mxu0 0.0
  %102 = vmatprep.subr.mxu0 0.0
  %103 = vmatpush1.msra.mxu0 0.0
  %104 = vmatprep.subr.mxu0 0.0
  %105 = vmatpush1.msra.mxu0 0.0
  %106 = vmatprep.subr.mxu0 0.0
  %107 = vmatpush1.msra.mxu0 0.0
  %108 = vmatprep.subr.mxu0 0.0
  %109 = vmatpush1.msra.mxu0 0.0
  %110 = vmatprep.subr.mxu0 0.0
  %111 = vmatpush1.msra.mxu0 0.0
  %112 = vmatprep.subr.mxu0 0.0
  %113 = vmatpush1.msra.mxu0 0.0
  %114 = vmatprep.subr.mxu0 0.0
  %115 = vmatpush1.msra.mxu0 0.0
  %116 = vmatprep.subr.mxu0 0.0
  %117 = vmatpush1.msra.mxu0 %v31
  %118 = vmatprep.subr.mxu0 0.0
  %119 = vmatpush1.msra.mxu0 %v30
  %120 = vmatprep.subr.mxu0 0.0
  %121 = vmatpush2.msra.mxu0 0.0
  %122 = vmatprep.subr.mxu0 0.0
  %123 = vmatpush2.msra.mxu0 0.0
  %124 = vmatprep.subr.mxu0 0.0
  %125 = vmatpush2.msra.mxu0 0.0
  %126 = vmatprep.subr.mxu0 0.0
  %127 = vmatpush2.msra.mxu0 0.0
  %128 = vmatprep.subr.mxu0 0.0
  %129 = vmatpush2.msra.mxu0 0.0
  %130 = vmatprep.subr.mxu0 0.0
  %131 = vmatpush2.msra.mxu0 0.0
  %132 = vmatprep.subr.mxu0 0.0
  %133 = vmatpush2.msra.mxu0 0.0
  %134 = vmatprep.subr.mxu0 0.0
  %135 = vmatpush2.msra.mxu0 0.0
  %136 = vmatprep.subr.mxu0 0.0
  %137 = vmatpush2.msra.mxu0 0.0
  %138 = vmatprep.subr.mxu0 0.0
  %139 = vmatpush2.msra.mxu0 0.0
  %140 = vmatprep.subr.mxu0 0.0
  %141 = vmatpush2.msra.mxu0 0.0
  %142 = vmatprep.subr.mxu0 0.0
  %143 = vmatpush2.msra.mxu0 0.0
  %144 = vmatprep.subr.mxu0 0.0
  %145 = vmatpush2.msra.mxu0 0.0
  %146 = vmatprep.subr.mxu0 0.0
  %147 = vmatpush2.msra.mxu0 0.0
  %148 = vmatprep.subr.mxu0 0.0
  %149 = vmatpush2.msra.mxu0 0.0
  %150 = vmatprep.subr.mxu0 0.0
  %151 = vmatpush2.msra.mxu0 0.0
  %152 = vmatprep.mubr.f32.mxu0 0.0
  %153 = vmatmul.mubr.f32.gmra.mxu0 %v41
  %v154 = vpop.f32.mrf.mxu0
  %v155 = vadd.f32 %v37, %v154
  %v156 = vpop.f32.mrf.mxu0
  %157 = vmatprep.mubr.f32.mxu0 0.0
  %158 = vmatmul.mubr.f32.gmra.mxu0 %v44
  %v159 = vpop.f32.mrf.mxu0
  %v160 = vadd.f32 %v37, %v159
  %v161 = vpop.f32.mrf.mxu0
  %162 = vmatprep.mubr.f32.mxu0 0.0
  %163 = vmatmul.mubr.f32.gmra.mxu0 %v47
  %v164 = vpop.f32.mrf.mxu0
  %v165 = vadd.f32 %v37, %v164
  %v166 = vpop.f32.mrf.mxu0
  %167 = vmatprep.mubr.f32.mxu0 0.0
  %168 = vmatmul.mubr.f32.gmra.mxu0 %v50
  %v169 = vpop.f32.mrf.mxu0
  %v170 = vadd.f32 %v37, %v169
  %v171 = vpop.f32.mrf.mxu0
  %172 = vmatprep.mubr.f32.mxu0 0.0
  %173 = vmatmul.mubr.f32.gmra.mxu0 %v53
  %v174 = vpop.f32.mrf.mxu0
  %v175 = vadd.f32 %v37, %v174
  %v176 = vpop.f32.mrf.mxu0
  %177 = vmatprep.mubr.f32.mxu0 0.0
  %178 = vmatmul.mubr.f32.gmra.mxu0 %v56
  %v179 = vpop.f32.mrf.mxu0
  %v180 = vadd.f32 %v37, %v179
  %v181 = vpop.f32.mrf.mxu0
  %182 = vmatprep.mubr.f32.mxu0 0.0
  %183 = vmatmul.mubr.f32.gmra.mxu0 %v59
  %v184 = vpop.f32.mrf.mxu0
  %v185 = vadd.f32 %v37, %v184
  %v186 = vpop.f32.mrf.mxu0
  %187 = vmatprep.mubr.f32.mxu0 0.0
  %188 = vmatmul.mubr.f32.gmra.mxu0 %v62
  %v189 = vpop.f32.mrf.mxu0
  %v190 = vadd.f32 %v37, %v189
  %v191 = vpop.f32.mrf.mxu0
  %192 = vmatprep.mubr.f32.mxu0 0.0
  %193 = vmatmul.mubr.f32.gmra.mxu0 %v65
  %v194 = vpop.f32.mrf.mxu0
  %v195 = vadd.f32 %v37, %v194
  %v196 = vpop.f32.mrf.mxu0
  %197 = vmatprep.mubr.f32.mxu0 0.0
  %198 = vmatmul.mubr.f32.gmra.mxu0 %v68
  %v199 = vpop.f32.mrf.mxu0
  %v200 = vadd.f32 %v37, %v199
  %v201 = vpop.f32.mrf.mxu0
  %202 = vmatprep.mubr.f32.mxu0 0.0
  %203 = vmatmul.mubr.f32.gmra.mxu0 %v71
  %v204 = vpop.f32.mrf.mxu0
  %v205 = vadd.f32 %v37, %v204
  %v206 = vpop.f32.mrf.mxu0
  %207 = vmatprep.mubr.f32.mxu0 0.0
  %208 = vmatmul.mubr.f32.gmra.mxu0 %v74
  %v209 = vpop.f32.mrf.mxu0
  %v210 = vadd.f32 %v37, %v209
  %v211 = vpop.f32.mrf.mxu0
  %212 = vmatprep.mubr.f32.mxu0 0.0
  %213 = vmatmul.mubr.f32.gmra.mxu0 %v77
  %v214 = vpop.f32.mrf.mxu0
  %v215 = vadd.f32 %v37, %v214
  %v216 = vpop.f32.mrf.mxu0
  %217 = vmatprep.mubr.f32.mxu0 0.0
  %218 = vmatmul.mubr.f32.gmra.mxu0 %v80
  %v219 = vpop.f32.mrf.mxu0
  %v220 = vadd.f32 %v37, %v219
  %v221 = vpop.f32.mrf.mxu0
  %222 = vmatprep.mubr.f32.mxu0 0.0
  %223 = vmatmul.mubr.f32.gmra.mxu0 %v83
  %v224 = vpop.f32.mrf.mxu0
  %v225 = vadd.f32 %v37, %v224
  %v226 = vpop.f32.mrf.mxu0
  %227 = vmatprep.mubr.f32.mxu0 0.0
  %228 = vmatmul.mubr.f32.gmra.mxu0 %v86
  %v229 = vpop.f32.mrf.mxu0
  %v230 = vadd.f32 %v37, %v229
  %v231 = vpop.f32.mrf.mxu0
  %232 = vdwg.mxu0
  %vm233 = vcmask 523264
  %234 = vst.msk [vmem:[%s3] sm:$0xff] %vm233, %v155
  %235 = vst.msk [vmem:[%s3 + $0x8] sm:$0xff] %vm233, %v160
  %236 = vst.msk [vmem:[%s3 + $0x10] sm:$0xff] %vm233, %v165
  %237 = vst.msk [vmem:[%s3 + $0x18] sm:$0xff] %vm233, %v170
  %238 = vst.msk [vmem:[%s3 + $0x20] sm:$0xff] %vm233, %v175
  %239 = vst.msk [vmem:[%s3 + $0x28] sm:$0xff] %vm233, %v180
  %240 = vst.msk [vmem:[%s3 + $0x30] sm:$0xff] %vm233, %v185
  %241 = vst.msk [vmem:[%s3 + $0x38] sm:$0xff] %vm233, %v190
  %242 = vst.msk [vmem:[%s3 + $0x40] sm:$0xff] %vm233, %v195
  %243 = vst.msk [vmem:[%s3 + $0x48] sm:$0xff] %vm233, %v200
  %244 = vst.msk [vmem:[%s3 + $0x50] sm:$0xff] %vm233, %v205
  %245 = vst.msk [vmem:[%s3 + $0x58] sm:$0xff] %vm233, %v210
  %246 = vst.msk [vmem:[%s3 + $0x60] sm:$0xff] %vm233, %v215
  %247 = vst.msk [vmem:[%s3 + $0x68] sm:$0xff] %vm233, %v220
  %248 = vst.msk [vmem:[%s3 + $0x70] sm:$0xff] %vm233, %v225
  %249 = vst.msk [vmem:[%s3 + $0x78] sm:$0xff] %vm233, %v230
  // Predicated region
  $region14: #{dna_block_forward.22} parent=0 // pred_check
    _
  $region15: #{dna_block_forward.22} parent=0 // pred_check_branch
    %251 = sbr.rel (0) target = $region17
  $region16: #{dna_block_forward.22} parent=0 // pred_region
    _
  $region17: #{dna_block_forward.22} parent=0 // pred_fallthru
    _
  // Predicated region
  $region18: #{dna_block_forward.22} parent=0 // pred_check
    _
  $region19: #{dna_block_forward.22} parent=0 // pred_check_branch
    %253 = sbr.rel (0) target = $region21
  $region20: #{dna_block_forward.22} parent=0 // pred_region
    _
  $region21: #{dna_block_forward.22} parent=0 // pred_fallthru
    _

// kernel: dna_block_forward.27
$region0: #{dna_block_forward.27}
  #allocation0 [shape = 'u32[]', space=smem, size = 0x4, offset = 0x4, fixed_abs, tag = 'smem constant byte address 0x4 - core index']
  #allocation1 [shape = 'u32[144,128]{1,0:T(1,128)}', space=vmem, size = 0x12000, scoped, tag = 'internal scratch']
  %s0 = inlined_call_operand.vmem [shape: f32[128,64], index: 0, kind: input, shape index: {}]
  %s1 = inlined_call_operand.vmem [shape: f32[64,16], index: 1, kind: input, shape index: {}]
  %s2 = inlined_call_operand.vmem [shape: f32[1,16], index: 2, kind: input, shape index: {}]
  %s3 = inlined_call_operand.vmem [shape: f32[128,16], index: 3, kind: output, shape index: {}]
  %s4 = sld [smem:[#allocation0]]
  $region22: #{dna_block_forward.27} parent=0
    _
  %s6 = ssub.s32 1, %s4
  %s7 = scalar_select 0, %s6, %s4
  // Predicated region
  $region2: #{dna_block_forward.27} parent=0 // pred_check
    _
  $region3: #{dna_block_forward.27} parent=0 // pred_check_branch
    %9 = sbr.rel (0) target = $region5
  $region4: #{dna_block_forward.27} parent=0 // pred_region
    _
  $region5: #{dna_block_forward.27} parent=0 // pred_fallthru
    _
  // Predicated region
  $region6: #{dna_block_forward.27} parent=0 // pred_check
    _
  $region7: #{dna_block_forward.27} parent=0 // pred_check_branch
    %11 = sbr.rel (0) target = $region9
  $region8: #{dna_block_forward.27} parent=0 // pred_region
    _
  $region9: #{dna_block_forward.27} parent=0 // pred_fallthru
    _
  // Predicated region
  $region10: #{dna_block_forward.27} parent=0 // pred_check
    _
  $region11: #{dna_block_forward.27} parent=0 // pred_check_branch
    %13 = sbr.rel (0) target = $region13
  $region12: #{dna_block_forward.27} parent=0 // pred_region
    _
  $region13: #{dna_block_forward.27} parent=0 // pred_fallthru
    _
  %v14 = vld [vmem:[%s0] sm:$0xff]
  %v15 = vld [vmem:[%s0 + $0x8] sm:$0xff]
  %v16 = vld [vmem:[%s0 + $0x10] sm:$0xff]
  %v17 = vld [vmem:[%s0 + $0x18] sm:$0xff]
  %v18 = vld [vmem:[%s0 + $0x20] sm:$0xff]
  %v19 = vld [vmem:[%s0 + $0x28] sm:$0xff]
  %v20 = vld [vmem:[%s0 + $0x30] sm:$0xff]
  %v21 = vld [vmem:[%s0 + $0x38] sm:$0xff]
  %v22 = vld [vmem:[%s0 + $0x40] sm:$0xff]
  %v23 = vld [vmem:[%s0 + $0x48] sm:$0xff]
  %v24 = vld [vmem:[%s0 + $0x50] sm:$0xff]
  %v25 = vld [vmem:[%s0 + $0x58] sm:$0xff]
  %v26 = vld [vmem:[%s0 + $0x60] sm:$0xff]
  %v27 = vld [vmem:[%s0 + $0x68] sm:$0xff]
  %v28 = vld [vmem:[%s0 + $0x70] sm:$0xff]
  %v29 = vld [vmem:[%s0 + $0x78] sm:$0xff]
  %v30 = vld [vmem:[%s1] sm:$0xff]
  %v31 = vld [vmem:[%s1 + $0x8] sm:$0xff]
  %v32 = vld [vmem:[%s1 + $0x10] sm:$0xff]
  %v33 = vld [vmem:[%s1 + $0x18] sm:$0xff]
  %v34 = vld [vmem:[%s1 + $0x20] sm:$0xff]
  %v35 = vld [vmem:[%s1 + $0x28] sm:$0xff]
  %v36 = vld [vmem:[%s1 + $0x30] sm:$0xff]
  %v37 = vld [vmem:[%s1 + $0x38] sm:$0xff]
  %v38 = vld [vmem:[%s2] sm:$0x1]
  %v40 = vlaneseq
  %v41 = vshrl.u32 %v40, 7
  %v42 = vsub.s32 0, %v41
  %v43 = vrot.slane %v38, %v42
  %vm45 = vcmask 523264
  %v47 = vsel %vm45, %v14, 0
  %v50 = vsel %vm45, %v15, 0
  %v53 = vsel %vm45, %v16, 0
  %v56 = vsel %vm45, %v17, 0
  %v59 = vsel %vm45, %v18, 0
  %v62 = vsel %vm45, %v19, 0
  %v65 = vsel %vm45, %v20, 0
  %v68 = vsel %vm45, %v21, 0
  %v71 = vsel %vm45, %v22, 0
  %v74 = vsel %vm45, %v23, 0
  %v77 = vsel %vm45, %v24, 0
  %v80 = vsel %vm45, %v25, 0
  %v83 = vsel %vm45, %v26, 0
  %v86 = vsel %vm45, %v27, 0
  %v89 = vsel %vm45, %v28, 0
  %v92 = vsel %vm45, %v29, 0
  %94 = vmatprep.subr.mxu0 0.0
  %95 = vmatpush1.msra.mxu0 0.0
  %96 = vmatprep.subr.mxu0 0.0
  %97 = vmatpush1.msra.mxu0 0.0
  %98 = vmatprep.subr.mxu0 0.0
  %99 = vmatpush1.msra.mxu0 0.0
  %100 = vmatprep.subr.mxu0 0.0
  %101 = vmatpush1.msra.mxu0 0.0
  %102 = vmatprep.subr.mxu0 0.0
  %103 = vmatpush1.msra.mxu0 0.0
  %104 = vmatprep.subr.mxu0 0.0
  %105 = vmatpush1.msra.mxu0 0.0
  %106 = vmatprep.subr.mxu0 0.0
  %107 = vmatpush1.msra.mxu0 0.0
  %108 = vmatprep.subr.mxu0 0.0
  %109 = vmatpush1.msra.mxu0 0.0
  %110 = vmatprep.subr.mxu0 0.0
  %111 = vmatpush1.msra.mxu0 %v37
  %112 = vmatprep.subr.mxu0 0.0
  %113 = vmatpush1.msra.mxu0 %v36
  %114 = vmatprep.subr.mxu0 0.0
  %115 = vmatpush1.msra.mxu0 %v35
  %116 = vmatprep.subr.mxu0 0.0
  %117 = vmatpush1.msra.mxu0 %v34
  %118 = vmatprep.subr.mxu0 0.0
  %119 = vmatpush1.msra.mxu0 %v33
  %120 = vmatprep.subr.mxu0 0.0
  %121 = vmatpush1.msra.mxu0 %v32
  %122 = vmatprep.subr.mxu0 0.0
  %123 = vmatpush1.msra.mxu0 %v31
  %124 = vmatprep.subr.mxu0 0.0
  %125 = vmatpush1.msra.mxu0 %v30
  %126 = vmatprep.subr.mxu0 0.0
  %127 = vmatpush2.msra.mxu0 0.0
  %128 = vmatprep.subr.mxu0 0.0
  %129 = vmatpush2.msra.mxu0 0.0
  %130 = vmatprep.subr.mxu0 0.0
  %131 = vmatpush2.msra.mxu0 0.0
  %132 = vmatprep.subr.mxu0 0.0
  %133 = vmatpush2.msra.mxu0 0.0
  %134 = vmatprep.subr.mxu0 0.0
  %135 = vmatpush2.msra.mxu0 0.0
  %136 = vmatprep.subr.mxu0 0.0
  %137 = vmatpush2.msra.mxu0 0.0
  %138 = vmatprep.subr.mxu0 0.0
  %139 = vmatpush2.msra.mxu0 0.0
  %140 = vmatprep.subr.mxu0 0.0
  %141 = vmatpush2.msra.mxu0 0.0
  %142 = vmatprep.subr.mxu0 0.0
  %143 = vmatpush2.msra.mxu0 0.0
  %144 = vmatprep.subr.mxu0 0.0
  %145 = vmatpush2.msra.mxu0 0.0
  %146 = vmatprep.subr.mxu0 0.0
  %147 = vmatpush2.msra.mxu0 0.0
  %148 = vmatprep.subr.mxu0 0.0
  %149 = vmatpush2.msra.mxu0 0.0
  %150 = vmatprep.subr.mxu0 0.0
  %151 = vmatpush2.msra.mxu0 0.0
  %152 = vmatprep.subr.mxu0 0.0
  %153 = vmatpush2.msra.mxu0 0.0
  %154 = vmatprep.subr.mxu0 0.0
  %155 = vmatpush2.msra.mxu0 0.0
  %156 = vmatprep.subr.mxu0 0.0
  %157 = vmatpush2.msra.mxu0 0.0
  %158 = vmatprep.mubr.f32.mxu0 0.0
  %159 = vmatmul.mubr.f32.gmra.mxu0 %v47
  %v160 = vpop.f32.mrf.mxu0
  %v161 = vadd.f32 %v43, %v160
  %v162 = vpop.f32.mrf.mxu0
  %163 = vmatprep.mubr.f32.mxu0 0.0
  %164 = vmatmul.mubr.f32.gmra.mxu0 %v50
  %v165 = vpop.f32.mrf.mxu0
  %v166 = vadd.f32 %v43, %v165
  %v167 = vpop.f32.mrf.mxu0
  %168 = vmatprep.mubr.f32.mxu0 0.0
  %169 = vmatmul.mubr.f32.gmra.mxu0 %v53
  %v170 = vpop.f32.mrf.mxu0
  %v171 = vadd.f32 %v43, %v170
  %v172 = vpop.f32.mrf.mxu0
  %173 = vmatprep.mubr.f32.mxu0 0.0
  %174 = vmatmul.mubr.f32.gmra.mxu0 %v56
  %v175 = vpop.f32.mrf.mxu0
  %v176 = vadd.f32 %v43, %v175
  %v177 = vpop.f32.mrf.mxu0
  %178 = vmatprep.mubr.f32.mxu0 0.0
  %179 = vmatmul.mubr.f32.gmra.mxu0 %v59
  %v180 = vpop.f32.mrf.mxu0
  %v181 = vadd.f32 %v43, %v180
  %v182 = vpop.f32.mrf.mxu0
  %183 = vmatprep.mubr.f32.mxu0 0.0
  %184 = vmatmul.mubr.f32.gmra.mxu0 %v62
  %v185 = vpop.f32.mrf.mxu0
  %v186 = vadd.f32 %v43, %v185
  %v187 = vpop.f32.mrf.mxu0
  %188 = vmatprep.mubr.f32.mxu0 0.0
  %189 = vmatmul.mubr.f32.gmra.mxu0 %v65
  %v190 = vpop.f32.mrf.mxu0
  %v191 = vadd.f32 %v43, %v190
  %v192 = vpop.f32.mrf.mxu0
  %193 = vmatprep.mubr.f32.mxu0 0.0
  %194 = vmatmul.mubr.f32.gmra.mxu0 %v68
  %v195 = vpop.f32.mrf.mxu0
  %v196 = vadd.f32 %v43, %v195
  %v197 = vpop.f32.mrf.mxu0
  %198 = vmatprep.mubr.f32.mxu0 0.0
  %199 = vmatmul.mubr.f32.gmra.mxu0 %v71
  %v200 = vpop.f32.mrf.mxu0
  %v201 = vadd.f32 %v43, %v200
  %v202 = vpop.f32.mrf.mxu0
  %203 = vmatprep.mubr.f32.mxu0 0.0
  %204 = vmatmul.mubr.f32.gmra.mxu0 %v74
  %v205 = vpop.f32.mrf.mxu0
  %v206 = vadd.f32 %v43, %v205
  %v207 = vpop.f32.mrf.mxu0
  %208 = vmatprep.mubr.f32.mxu0 0.0
  %209 = vmatmul.mubr.f32.gmra.mxu0 %v77
  %v210 = vpop.f32.mrf.mxu0
  %v211 = vadd.f32 %v43, %v210
  %v212 = vpop.f32.mrf.mxu0
  %213 = vmatprep.mubr.f32.mxu0 0.0
  %214 = vmatmul.mubr.f32.gmra.mxu0 %v80
  %v215 = vpop.f32.mrf.mxu0
  %v216 = vadd.f32 %v43, %v215
  %v217 = vpop.f32.mrf.mxu0
  %218 = vmatprep.mubr.f32.mxu0 0.0
  %219 = vmatmul.mubr.f32.gmra.mxu0 %v83
  %v220 = vpop.f32.mrf.mxu0
  %v221 = vadd.f32 %v43, %v220
  %v222 = vpop.f32.mrf.mxu0
  %223 = vmatprep.mubr.f32.mxu0 0.0
  %224 = vmatmul.mubr.f32.gmra.mxu0 %v86
  %v225 = vpop.f32.mrf.mxu0
  %v226 = vadd.f32 %v43, %v225
  %v227 = vpop.f32.mrf.mxu0
  %228 = vmatprep.mubr.f32.mxu0 0.0
  %229 = vmatmul.mubr.f32.gmra.mxu0 %v89
  %v230 = vpop.f32.mrf.mxu0
  %v231 = vadd.f32 %v43, %v230
  %v232 = vpop.f32.mrf.mxu0
  %233 = vmatprep.mubr.f32.mxu0 0.0
  %234 = vmatmul.mubr.f32.gmra.mxu0 %v92
  %v235 = vpop.f32.mrf.mxu0
  %v236 = vadd.f32 %v43, %v235
  %v237 = vpop.f32.mrf.mxu0
  %238 = vdwg.mxu0
  %vm239 = vcmask 130048
  %240 = vst.msk [vmem:[%s3] sm:$0xff] %vm239, %v161
  %241 = vst.msk [vmem:[%s3 + $0x8] sm:$0xff] %vm239, %v166
  %242 = vst.msk [vmem:[%s3 + $0x10] sm:$0xff] %vm239, %v171
  %243 = vst.msk [vmem:[%s3 + $0x18] sm:$0xff] %vm239, %v176
  %244 = vst.msk [vmem:[%s3 + $0x20] sm:$0xff] %vm239, %v181
  %245 = vst.msk [vmem:[%s3 + $0x28] sm:$0xff] %vm239, %v186
  %246 = vst.msk [vmem:[%s3 + $0x30] sm:$0xff] %vm239, %v191
  %247 = vst.msk [vmem:[%s3 + $0x38] sm:$0xff] %vm239, %v196
  %248 = vst.msk [vmem:[%s3 + $0x40] sm:$0xff] %vm239, %v201
  %249 = vst.msk [vmem:[%s3 + $0x48] sm:$0xff] %vm239, %v206
  %250 = vst.msk [vmem:[%s3 + $0x50] sm:$0xff] %vm239, %v211
  %251 = vst.msk [vmem:[%s3 + $0x58] sm:$0xff] %vm239, %v216
  %252 = vst.msk [vmem:[%s3 + $0x60] sm:$0xff] %vm239, %v221
  %253 = vst.msk [vmem:[%s3 + $0x68] sm:$0xff] %vm239, %v226
  %254 = vst.msk [vmem:[%s3 + $0x70] sm:$0xff] %vm239, %v231
  %255 = vst.msk [vmem:[%s3 + $0x78] sm:$0xff] %vm239, %v236
  // Predicated region
  $region14: #{dna_block_forward.27} parent=0 // pred_check
    _
  $region15: #{dna_block_forward.27} parent=0 // pred_check_branch
    %257 = sbr.rel (0) target = $region17
  $region16: #{dna_block_forward.27} parent=0 // pred_region
    _
  $region17: #{dna_block_forward.27} parent=0 // pred_fallthru
    _
  // Predicated region
  $region18: #{dna_block_forward.27} parent=0 // pred_check
    _
  $region19: #{dna_block_forward.27} parent=0 // pred_check_branch
    %259 = sbr.rel (0) target = $region21
  $region20: #{dna_block_forward.27} parent=0 // pred_region
    _
  $region21: #{dna_block_forward.27} parent=0 // pred_fallthru
    _

// kernel: dna_block_forward.28
$region0: #{dna_block_forward.28}
  #allocation0 [shape = 'u32[]', space=smem, size = 0x4, offset = 0x4, fixed_abs, tag = 'smem constant byte address 0x4 - core index']
  #allocation1 [shape = 'u32[144,128]{1,0:T(1,128)}', space=vmem, size = 0x12000, scoped, tag = 'internal scratch']
  %s0 = inlined_call_operand.vmem [shape: f32[16,32], index: 0, kind: input, shape index: {}]
  %s1 = inlined_call_operand.vmem [shape: f32[32,16], index: 1, kind: input, shape index: {}]
  %s2 = inlined_call_operand.vmem [shape: f32[1,16], index: 2, kind: input, shape index: {}]
  %s3 = inlined_call_operand.vmem [shape: f32[16,16], index: 3, kind: output, shape index: {}]
  %s4 = sld [smem:[#allocation0]]
  $region22: #{dna_block_forward.28} parent=0
    _
  %s6 = ssub.s32 1, %s4
  %s7 = scalar_select 0, %s6, %s4
  // Predicated region
  $region2: #{dna_block_forward.28} parent=0 // pred_check
    _
  $region3: #{dna_block_forward.28} parent=0 // pred_check_branch
    %9 = sbr.rel (0) target = $region5
  $region4: #{dna_block_forward.28} parent=0 // pred_region
    _
  $region5: #{dna_block_forward.28} parent=0 // pred_fallthru
    _
  // Predicated region
  $region6: #{dna_block_forward.28} parent=0 // pred_check
    _
  $region7: #{dna_block_forward.28} parent=0 // pred_check_branch
    %11 = sbr.rel (0) target = $region9
  $region8: #{dna_block_forward.28} parent=0 // pred_region
    _
  $region9: #{dna_block_forward.28} parent=0 // pred_fallthru
    _
  // Predicated region
  $region10: #{dna_block_forward.28} parent=0 // pred_check
    _
  $region11: #{dna_block_forward.28} parent=0 // pred_check_branch
    %13 = sbr.rel (0) target = $region13
  $region12: #{dna_block_forward.28} parent=0 // pred_region
    _
  $region13: #{dna_block_forward.28} parent=0 // pred_fallthru
    _
  %v14 = vld [vmem:[%s0] sm:$0xff]
  %v15 = vld [vmem:[%s0 + $0x8] sm:$0xff]
  %v16 = vld [vmem:[%s1] sm:$0xff]
  %v17 = vld [vmem:[%s1 + $0x8] sm:$0xff]
  %v18 = vld [vmem:[%s1 + $0x10] sm:$0xff]
  %v19 = vld [vmem:[%s1 + $0x18] sm:$0xff]
  %v20 = vld [vmem:[%s2] sm:$0x1]
  %v22 = vlaneseq
  %v23 = vshrl.u32 %v22, 7
  %v24 = vsub.s32 0, %v23
  %v25 = vrot.slane %v20, %v24
  %vm27 = vcmask 261120
  %v29 = vsel %vm27, %v14, 0
  %v32 = vsel %vm27, %v15, 0
  %34 = vmatprep.subr.mxu0 0.0
  %35 = vmatpush1.msra.mxu0 0.0
  %36 = vmatprep.subr.mxu0 0.0
  %37 = vmatpush1.msra.mxu0 0.0
  %38 = vmatprep.subr.mxu0 0.0
  %39 = vmatpush1.msra.mxu0 0.0
  %40 = vmatprep.subr.mxu0 0.0
  %41 = vmatpush1.msra.mxu0 0.0
  %42 = vmatprep.subr.mxu0 0.0
  %43 = vmatpush1.msra.mxu0 0.0
  %44 = vmatprep.subr.mxu0 0.0
  %45 = vmatpush1.msra.mxu0 0.0
  %46 = vmatprep.subr.mxu0 0.0
  %47 = vmatpush1.msra.mxu0 0.0
  %48 = vmatprep.subr.mxu0 0.0
  %49 = vmatpush1.msra.mxu0 0.0
  %50 = vmatprep.subr.mxu0 0.0
  %51 = vmatpush1.msra.mxu0 0.0
  %52 = vmatprep.subr.mxu0 0.0
  %53 = vmatpush1.msra.mxu0 0.0
  %54 = vmatprep.subr.mxu0 0.0
  %55 = vmatpush1.msra.mxu0 0.0
  %56 = vmatprep.subr.mxu0 0.0
  %57 = vmatpush1.msra.mxu0 0.0
  %58 = vmatprep.subr.mxu0 0.0
  %59 = vmatpush1.msra.mxu0 %v19
  %60 = vmatprep.subr.mxu0 0.0
  %61 = vmatpush1.msra.mxu0 %v18
  %62 = vmatprep.subr.mxu0 0.0
  %63 = vmatpush1.msra.mxu0 %v17
  %64 = vmatprep.subr.mxu0 0.0
  %65 = vmatpush1.msra.mxu0 %v16
  %66 = vmatprep.subr.mxu0 0.0
  %67 = vmatpush2.msra.mxu0 0.0
  %68 = vmatprep.subr.mxu0 0.0
  %69 = vmatpush2.msra.mxu0 0.0
  %70 = vmatprep.subr.mxu0 0.0
  %71 = vmatpush2.msra.mxu0 0.0
  %72 = vmatprep.subr.mxu0 0.0
  %73 = vmatpush2.msra.mxu0 0.0
  %74 = vmatprep.subr.mxu0 0.0
  %75 = vmatpush2.msra.mxu0 0.0
  %76 = vmatprep.subr.mxu0 0.0
  %77 = vmatpush2.msra.mxu0 0.0
  %78 = vmatprep.subr.mxu0 0.0
  %79 = vmatpush2.msra.mxu0 0.0
  %80 = vmatprep.subr.mxu0 0.0
  %81 = vmatpush2.msra.mxu0 0.0
  %82 = vmatprep.subr.mxu0 0.0
  %83 = vmatpush2.msra.mxu0 0.0
  %84 = vmatprep.subr.mxu0 0.0
  %85 = vmatpush2.msra.mxu0 0.0
  %86 = vmatprep.subr.mxu0 0.0
  %87 = vmatpush2.msra.mxu0 0.0
  %88 = vmatprep.subr.mxu0 0.0
  %89 = vmatpush2.msra.mxu0 0.0
  %90 = vmatprep.subr.mxu0 0.0
  %91 = vmatpush2.msra.mxu0 0.0
  %92 = vmatprep.subr.mxu0 0.0
  %93 = vmatpush2.msra.mxu0 0.0
  %94 = vmatprep.subr.mxu0 0.0
  %95 = vmatpush2.msra.mxu0 0.0
  %96 = vmatprep.subr.mxu0 0.0
  %97 = vmatpush2.msra.mxu0 0.0
  %98 = vmatprep.mubr.f32.mxu0 0.0
  %99 = vmatmul.mubr.f32.gmra.mxu0 %v29
  %v100 = vpop.f32.mrf.mxu0
  %v101 = vadd.f32 %v25, %v100
  %v102 = vpop.f32.mrf.mxu0
  %103 = vmatprep.mubr.f32.mxu0 0.0
  %104 = vmatmul.mubr.f32.gmra.mxu0 %v32
  %v105 = vpop.f32.mrf.mxu0
  %v106 = vadd.f32 %v25, %v105
  %v107 = vpop.f32.mrf.mxu0
  %108 = vdwg.mxu0
  %vm109 = vcmask 130048
  %110 = vst.msk [vmem:[%s3] sm:$0xff] %vm109, %v101
  %111 = vst.msk [vmem:[%s3 + $0x8] sm:$0xff] %vm109, %v106
  // Predicated region
  $region14: #{dna_block_forward.28} parent=0 // pred_check
    _
  $region15: #{dna_block_forward.28} parent=0 // pred_check_branch
    %113 = sbr.rel (0) target = $region17
  $region16: #{dna_block_forward.28} parent=0 // pred_region
    _
  $region17: #{dna_block_forward.28} parent=0 // pred_fallthru
    _
  // Predicated region
  $region18: #{dna_block_forward.28} parent=0 // pred_check
    _
  $region19: #{dna_block_forward.28} parent=0 // pred_check_branch
    %115 = sbr.rel (0) target = $region21
  $region20: #{dna_block_forward.28} parent=0 // pred_region
    _
  $region21: #{dna_block_forward.28} parent=0 // pred_fallthru
    _

// kernel: dna_block_forward.29
$region0: #{dna_block_forward.29}
  #allocation0 [shape = 'u32[]', space=smem, size = 0x4, offset = 0x4, fixed_abs, tag = 'smem constant byte address 0x4 - core index']
  #allocation1 [shape = 'u32[144,128]{1,0:T(1,128)}', space=vmem, size = 0x12000, scoped, tag = 'internal scratch']
  %s0 = inlined_call_operand.vmem [shape: f32[32,8], index: 0, kind: input, shape index: {}]
  %s1 = inlined_call_operand.vmem [shape: f32[8,64], index: 1, kind: input, shape index: {}]
  %s2 = inlined_call_operand.vmem [shape: f32[1,64], index: 2, kind: input, shape index: {}]
  %s3 = inlined_call_operand.vmem [shape: f32[32,64], index: 3, kind: output, shape index: {}]
  %s4 = sld [smem:[#allocation0]]
  $region22: #{dna_block_forward.29} parent=0
    _
  %s6 = ssub.s32 1, %s4
  %s7 = scalar_select 0, %s6, %s4
  // Predicated region
  $region2: #{dna_block_forward.29} parent=0 // pred_check
    _
  $region3: #{dna_block_forward.29} parent=0 // pred_check_branch
    %9 = sbr.rel (0) target = $region5
  $region4: #{dna_block_forward.29} parent=0 // pred_region
    _
  $region5: #{dna_block_forward.29} parent=0 // pred_fallthru
    _
  // Predicated region
  $region6: #{dna_block_forward.29} parent=0 // pred_check
    _
  $region7: #{dna_block_forward.29} parent=0 // pred_check_branch
    %11 = sbr.rel (0) target = $region9
  $region8: #{dna_block_forward.29} parent=0 // pred_region
    _
  $region9: #{dna_block_forward.29} parent=0 // pred_fallthru
    _
  // Predicated region
  $region10: #{dna_block_forward.29} parent=0 // pred_check
    _
  $region11: #{dna_block_forward.29} parent=0 // pred_check_branch
    %13 = sbr.rel (0) target = $region13
  $region12: #{dna_block_forward.29} parent=0 // pred_region
    _
  $region13: #{dna_block_forward.29} parent=0 // pred_fallthru
    _
  %v14 = vld [vmem:[%s0] sm:$0xff]
  %v15 = vld [vmem:[%s0 + $0x8] sm:$0xff]
  %v16 = vld [vmem:[%s0 + $0x10] sm:$0xff]
  %v17 = vld [vmem:[%s0 + $0x18] sm:$0xff]
  %v18 = vld [vmem:[%s1] sm:$0xff]
  %v19 = vld [vmem:[%s2] sm:$0x1]
  %v21 = vlaneseq
  %v22 = vshrl.u32 %v21, 7
  %v23 = vsub.s32 0, %v22
  %v24 = vrot.slane %v19, %v23
  %vm26 = vcmask 64512
  %v28 = vsel %vm26, %v14, 0
  %v31 = vsel %vm26, %v15, 0
  %v34 = vsel %vm26, %v16, 0
  %v37 = vsel %vm26, %v17, 0
  %39 = vmatprep.subr.mxu0 0.0
  %40 = vmatpush1.msra.mxu0 0.0
  %41 = vmatprep.subr.mxu0 0.0
  %42 = vmatpush1.msra.mxu0 0.0
  %43 = vmatprep.subr.mxu0 0.0
  %44 = vmatpush1.msra.mxu0 0.0
  %45 = vmatprep.subr.mxu0 0.0
  %46 = vmatpush1.msra.mxu0 0.0
  %47 = vmatprep.subr.mxu0 0.0
  %48 = vmatpush1.msra.mxu0 0.0
  %49 = vmatprep.subr.mxu0 0.0
  %50 = vmatpush1.msra.mxu0 0.0
  %51 = vmatprep.subr.mxu0 0.0
  %52 = vmatpush1.msra.mxu0 0.0
  %53 = vmatprep.subr.mxu0 0.0
  %54 = vmatpush1.msra.mxu0 0.0
  %55 = vmatprep.subr.mxu0 0.0
  %56 = vmatpush1.msra.mxu0 0.0
  %57 = vmatprep.subr.mxu0 0.0
  %58 = vmatpush1.msra.mxu0 0.0
  %59 = vmatprep.subr.mxu0 0.0
  %60 = vmatpush1.msra.mxu0 0.0
  %61 = vmatprep.subr.mxu0 0.0
  %62 = vmatpush1.msra.mxu0 0.0
  %63 = vmatprep.subr.mxu0 0.0
  %64 = vmatpush1.msra.mxu0 0.0
  %65 = vmatprep.subr.mxu0 0.0
  %66 = vmatpush1.msra.mxu0 0.0
  %67 = vmatprep.subr.mxu0 0.0
  %68 = vmatpush1.msra.mxu0 0.0
  %69 = vmatprep.subr.mxu0 0.0
  %70 = vmatpush1.msra.mxu0 %v18
  %71 = vmatprep.subr.mxu0 0.0
  %72 = vmatpush2.msra.mxu0 0.0
  %73 = vmatprep.subr.mxu0 0.0
  %74 = vmatpush2.msra.mxu0 0.0
  %75 = vmatprep.subr.mxu0 0.0
  %76 = vmatpush2.msra.mxu0 0.0
  %77 = vmatprep.subr.mxu0 0.0
  %78 = vmatpush2.msra.mxu0 0.0
  %79 = vmatprep.subr.mxu0 0.0
  %80 = vmatpush2.msra.mxu0 0.0
  %81 = vmatprep.subr.mxu0 0.0
  %82 = vmatpush2.msra.mxu0 0.0
  %83 = vmatprep.subr.mxu0 0.0
  %84 = vmatpush2.msra.mxu0 0.0
  %85 = vmatprep.subr.mxu0 0.0
  %86 = vmatpush2.msra.mxu0 0.0
  %87 = vmatprep.subr.mxu0 0.0
  %88 = vmatpush2.msra.mxu0 0.0
  %89 = vmatprep.subr.mxu0 0.0
  %90 = vmatpush2.msra.mxu0 0.0
  %91 = vmatprep.subr.mxu0 0.0
  %92 = vmatpush2.msra.mxu0 0.0
  %93 = vmatprep.subr.mxu0 0.0
  %94 = vmatpush2.msra.mxu0 0.0
  %95 = vmatprep.subr.mxu0 0.0
  %96 = vmatpush2.msra.mxu0 0.0
  %97 = vmatprep.subr.mxu0 0.0
  %98 = vmatpush2.msra.mxu0 0.0
  %99 = vmatprep.subr.mxu0 0.0
  %100 = vmatpush2.msra.mxu0 0.0
  %101 = vmatprep.subr.mxu0 0.0
  %102 = vmatpush2.msra.mxu0 0.0
  %103 = vmatprep.mubr.f32.mxu0 0.0
  %104 = vmatmul.mubr.f32.gmra.mxu0 %v28
  %v105 = vpop.f32.mrf.mxu0
  %v106 = vadd.f32 %v24, %v105
  %v107 = vpop.f32.mrf.mxu0
  %108 = vmatprep.mubr.f32.mxu0 0.0
  %109 = vmatmul.mubr.f32.gmra.mxu0 %v31
  %v110 = vpop.f32.mrf.mxu0
  %v111 = vadd.f32 %v24, %v110
  %v112 = vpop.f32.mrf.mxu0
  %113 = vmatprep.mubr.f32.mxu0 0.0
  %114 = vmatmul.mubr.f32.gmra.mxu0 %v34
  %v115 = vpop.f32.mrf.mxu0
  %v116 = vadd.f32 %v24, %v115
  %v117 = vpop.f32.mrf.mxu0
  %118 = vmatprep.mubr.f32.mxu0 0.0
  %119 = vmatmul.mubr.f32.gmra.mxu0 %v37
  %v120 = vpop.f32.mrf.mxu0
  %v121 = vadd.f32 %v24, %v120
  %v122 = vpop.f32.mrf.mxu0
  %123 = vdwg.mxu0
  %vm124 = vcmask 523264
  %125 = vst.msk [vmem:[%s3] sm:$0xff] %vm124, %v106
  %126 = vst.msk [vmem:[%s3 + $0x8] sm:$0xff] %vm124, %v111
  %127 = vst.msk [vmem:[%s3 + $0x10] sm:$0xff] %vm124, %v116
  %128 = vst.msk [vmem:[%s3 + $0x18] sm:$0xff] %vm124, %v121
  // Predicated region
  $region14: #{dna_block_forward.29} parent=0 // pred_check
    _
  $region15: #{dna_block_forward.29} parent=0 // pred_check_branch
    %130 = sbr.rel (0) target = $region17
  $region16: #{dna_block_forward.29} parent=0 // pred_region
    _
  $region17: #{dna_block_forward.29} parent=0 // pred_fallthru
    _
  // Predicated region
  $region18: #{dna_block_forward.29} parent=0 // pred_check
    _
  $region19: #{dna_block_forward.29} parent=0 // pred_check_branch
    %132 = sbr.rel (0) target = $region21
  $region20: #{dna_block_forward.29} parent=0 // pred_region
    _
  $region21: #{dna_block_forward.29} parent=0 // pred_fallthru
    _

</llo_original>
